<compile_context>
chip_gen: v6e
topology: v6e:2x2x1
jax: 0.10.0
libtpu: 0.0.40
codegen_flags: <defaults>
</compile_context>

<pallas_src>
import functools

import jax
import jax.numpy as jnp
from jax import lax
from jax.experimental import pallas as pl
from jax.experimental.pallas import tpu as pltpu

_LANE = 128
_SUBLANE = 8


def _round_up(x, m):
    return ((x + m - 1) // m) * m


def _decoder_kernel(tokens_ref, hc0_ref, emb_ref, w_ih_ref, w_hh_ref, b_ref,
                    enc_ref, w_aa_ref, w_ah_ref, b_attn_ref,
                    out_seq_ref, hc_n_ref, logp_ref, x_buf):
    B, T = tokens_ref.shape              # real batch, seq len (tokens live in SMEM)
    _, Bp, H = hc0_ref.shape             # sublane-padded batch, hidden size
    E = emb_ref.shape[1]

    # ---- embedding gather fused into the kernel (time-major rows: index t*Bp + b) ----
    x_buf[...] = jnp.zeros_like(x_buf)   # padded batch rows stay exactly zero
    for t in range(T):
        for b in range(B):
            tok = tokens_ref[b, t]                                   # scalar from SMEM
            x_buf[pl.ds(t * Bp + b, 1), :] = emb_ref[pl.ds(tok, 1), :]

    # ---- hoisted input projection: one [T*Bp, E] x [E, 4H] MXU pass + bias ----
    gates_x = jnp.dot(x_buf[...], w_ih_ref[...],
                      preferred_element_type=jnp.float32) + b_ref[...]   # [T*Bp, 4H]

    w_hh = w_hh_ref[...]
    h = hc0_ref[0]                       # [Bp, H]
    c = hc0_ref[1]                       # [Bp, H]

    # ---- LSTM recurrence, fully static unroll (PyTorch gate order i, f, g, o) ----
    for t in range(T):
        # [Bp, 4H] = one exact (8,128) tile per step (H = 32)
        gates = gates_x[t * Bp:(t + 1) * Bp] + jnp.dot(
            h, w_hh, preferred_element_type=jnp.float32)
        sig = jax.nn.sigmoid(gates)      # one EUP pass over i/f/o (g slice unused)
        tnh = jnp.tanh(gates)            # one EUP pass (only g slice used)
        i_g = sig[:, 0:H]
        f_g = sig[:, H:2 * H]
        o_g = sig[:, 3 * H:4 * H]
        g_g = tnh[:, 2 * H:3 * H]
        c = f_g * c + i_g * g_g
        h = o_g * jnp.tanh(c)
        # batch-major, lane-dense output buffer; static lane window -> no transpose ever
        out_seq_ref[:, pl.ds(t * H, H)] = h
    hc_n_ref[0] = h
    hc_n_ref[1] = c

    # ---- attention over encoder outputs (transpose-free: VPU multiply + reductions) ----
    enc = enc_ref[...]                                              # [Bp, S, H]
    scores = jnp.sum(enc * h[:, None, :], axis=-1)                  # [Bp, S]
    m1 = jnp.max(scores, axis=-1, keepdims=True)
    lse1 = jnp.log(jnp.sum(jnp.exp(scores - m1), axis=-1, keepdims=True)) + m1
    # torch module applies log_softmax and uses the *log*-weights directly for the
    # weighted sum -- reproduced faithfully here.
    alpha = scores - lse1                                           # [Bp, S]
    attn_vec = jnp.sum(alpha[:, :, None] * enc, axis=1)             # [Bp, H]

    # ---- hidden2word_attn as two K=H dots (no lane concat) + log-softmax over Vp ----
    logits = (jnp.dot(attn_vec, w_aa_ref[...], preferred_element_type=jnp.float32)
              + jnp.dot(h, w_ah_ref[...], preferred_element_type=jnp.float32)
              + b_attn_ref[...])                                    # [Bp, Vp]
    m2 = jnp.max(logits, axis=-1, keepdims=True)
    lse2 = jnp.log(jnp.sum(jnp.exp(logits - m2), axis=-1, keepdims=True)) + m2
    logp_ref[...] = logits - lse2


def preprocess_params(params):
    """One-time parameter prep: lane-pad vocab, split hidden2word_attn (no per-call pads)."""
    f32 = jnp.float32
    H = params["w_hh"].shape[0]
    V = params["w_attn"].shape[1]
    Vp = _round_up(V, _LANE)
    pad_v = Vp - V
    return {
        "emb_table": params["emb_table"].astype(f32),
        "w_ih": params["w_ih"].astype(f32),
        "w_hh": params["w_hh"].astype(f32),
        "b": params["b"].astype(f32),
        # split [2H, Vp] into the attn-vec half and the hidden half -> avoids lane concat
        "w_attn_a": jnp.pad(params["w_attn"][:H].astype(f32), ((0, 0), (0, pad_v))),
        "w_attn_h": jnp.pad(params["w_attn"][H:].astype(f32), ((0, 0), (0, pad_v))),
        # padded vocab lanes get a huge negative bias -> contribute exactly 0 to softmax
        "b_attn": jnp.pad(params["b_attn"].astype(f32), ((0, 0), (0, pad_v)),
                          constant_values=-1e30),
    }


@functools.partial(jax.jit, static_argnames=("vocab_size",))
def rnn_decoder_forward(tokens, hidden, output_enc, prep, *, vocab_size):
    """tokens: [B, T] int32; hidden: (h0, c0) each [1, B, H]; output_enc: [B, S, H]."""
    h0, c0 = hidden
    B, T = tokens.shape
    H = h0.shape[-1]
    E = prep["w_ih"].shape[0]
    Vp = prep["b_attn"].shape[-1]
    Bp = _round_up(B, _SUBLANE)          # sublane-pad batch (B=2 -> 8)

    # merge h0/c0 into one input and pad the batch dim; pad encoder outputs likewise.
    hc0 = jnp.concatenate([h0, c0], axis=0).astype(jnp.float32)        # [2, B, H]
    hc0 = jnp.pad(hc0, ((0, 0), (0, Bp - B), (0, 0)))                  # [2, Bp, H]
    enc_p = jnp.pad(output_enc.astype(jnp.float32),
                    ((0, Bp - B), (0, 0), (0, 0)))                     # [Bp, S, H]

    smem = pl.BlockSpec(memory_space=pltpu.MemorySpace.SMEM)
    vmem = pl.BlockSpec(memory_space=pltpu.MemorySpace.VMEM)

    out_seq, hc_n, logp = pl.pallas_call(
        _decoder_kernel,
        in_specs=[smem] + [vmem] * 9,
        out_specs=[vmem] * 3,
        out_shape=(
            jax.ShapeDtypeStruct((Bp, T * H), jnp.float32),   # LSTM outputs, batch-major
            jax.ShapeDtypeStruct((2, Bp, H), jnp.float32),    # (h_n, c_n)
            jax.ShapeDtypeStruct((Bp, Vp), jnp.float32),      # log-probs (lane-padded)
        ),
        scratch_shapes=[pltpu.VMEM((T * Bp, E), jnp.float32)],
    )(tokens.astype(jnp.int32), hc0, prep["emb_table"], prep["w_ih"], prep["w_hh"],
      prep["b"], enc_p, prep["w_attn_a"], prep["w_attn_h"], prep["b_attn"])

    output = out_seq.reshape(Bp, T, H)[:B]           # [B, T, H] (batch_first), free view
    h_n = hc_n[0:1, :B, :]                           # [1, B, H]
    c_n = hc_n[1:2, :B, :]                           # [1, B, H]
    log_probs = logp[:B, :vocab_size][:, None, :]    # [B, 1, V]
    return output, (h_n, c_n), log_probs


# ----------------------- pure-JAX reference (for verification) -----------------------
def _ref_forward(tokens, hidden, output_enc, params):
    h0, c0 = hidden
    H = h0.shape[-1]
    emb = params["emb_table"][tokens]            # [B, T, E]

    def step(carry, x_t):
        h, c = carry
        gates = x_t @ params["w_ih"] + h @ params["w_hh"] + params["b"]
        i_g = jax.nn.sigmoid(gates[:, 0:H])
        f_g = jax.nn.sigmoid(gates[:, H:2 * H])
        g_g = jnp.tanh(gates[:, 2 * H:3 * H])
        o_g = jax.nn.sigmoid(gates[:, 3 * H:4 * H])
        c_new = f_g * c + i_g * g_g
        h_new = o_g * jnp.tanh(c_new)
        return (h_new, c_new), h_new

    (h_f, c_f), outs = lax.scan(step, (h0[0], c0[0]), jnp.transpose(emb, (1, 0, 2)))
    output = jnp.transpose(outs, (1, 0, 2))
    scores = jnp.einsum('bsh,bh->bs', output_enc, h_f)
    alpha = jax.nn.log_softmax(scores, axis=-1)
    attn_vec = jnp.einsum('bs,bsh->bh', alpha, output_enc)
    concat = jnp.concatenate([attn_vec, h_f], axis=-1)
    log_probs = jax.nn.log_softmax(concat @ params["w_attn"] + params["b_attn"], axis=-1)
    return output, (h_f[None], c_f[None]), log_probs[:, None, :]


if __name__ == "__main__":
    # sizes implied by the module: emb_dim=E, hidden_size=H, output_vocab_size=V
    B, T, E, H, S, V = 2, 8, 32, 32, 12, 64

    key = jax.random.PRNGKey(0)
    ks = jax.random.split(key, 10)
    params = {
        "emb_table": 0.1 * jax.random.normal(ks[0], (V, E), jnp.float32),
        "w_ih": 0.1 * jax.random.normal(ks[1], (E, 4 * H), jnp.float32),
        "w_hh": 0.1 * jax.random.normal(ks[2], (H, 4 * H), jnp.float32),
        # b = b_ih + b_hh of the PyTorch LSTM, stored as [1, 4H]
        "b": (0.1 * jax.random.normal(ks[3], (1, 4 * H), jnp.float32)
              + 0.1 * jax.random.normal(ks[4], (1, 4 * H), jnp.float32)),
        "w_attn": 0.1 * jax.random.normal(ks[5], (2 * H, V), jnp.float32),
        "b_attn": 0.1 * jax.random.normal(ks[6], (1, V), jnp.float32),
        # TODO(synk): self.hidden2word is defined in __init__ but unused in forward; omitted.
    }

    tokens = jax.random.randint(ks[7], (B, T), 0, V, dtype=jnp.int32)
    h0 = 0.5 * jax.random.normal(ks[8], (1, B, H), jnp.float32)
    c0 = 0.5 * jax.random.normal(ks[9], (1, B, H), jnp.float32)
    output_enc = 0.5 * jax.random.normal(jax.random.fold_in(key, 99), (B, S, H), jnp.float32)

    prep = preprocess_params(params)   # one-time layout prep (padding/splitting hoisted)

    out, (h_n, c_n), log_probs = rnn_decoder_forward(
        tokens, (h0, c0), output_enc, prep, vocab_size=V)
    jax.block_until_ready((out, h_n, c_n, log_probs))

    r_out, (r_h, r_c), r_lp = _ref_forward(tokens, (h0, c0), output_enc, params)
    assert out.shape == (B, T, H) and h_n.shape == (1, B, H) and log_probs.shape == (B, 1, V)
    assert jnp.allclose(out, r_out, atol=1e-4, rtol=1e-4)
    assert jnp.allclose(h_n, r_h, atol=1e-4, rtol=1e-4)
    assert jnp.allclose(c_n, r_c, atol=1e-4, rtol=1e-4)
    assert jnp.allclose(log_probs, r_lp, atol=1e-4, rtol=1e-4)

    print("KERNEL_OK")
</pallas_src>

<mosaic_0001>
module attributes {stable_mosaic.version = 11 : i64} {
  func.func @_decoder_kernel(%arg0: memref<2x8xi32, #tpu.memory_space<smem>>, %arg1: memref<2x8x32xf32, #tpu.memory_space<vmem>>, %arg2: memref<64x32xf32, #tpu.memory_space<vmem>>, %arg3: memref<32x128xf32, #tpu.memory_space<vmem>>, %arg4: memref<32x128xf32, #tpu.memory_space<vmem>>, %arg5: memref<1x128xf32, #tpu.memory_space<vmem>>, %arg6: memref<8x12x32xf32, #tpu.memory_space<vmem>>, %arg7: memref<32x128xf32, #tpu.memory_space<vmem>>, %arg8: memref<32x128xf32, #tpu.memory_space<vmem>>, %arg9: memref<1x128xf32, #tpu.memory_space<vmem>>, %arg10: memref<8x256xf32, #tpu.memory_space<vmem>>, %arg11: memref<2x8x32xf32, #tpu.memory_space<vmem>>, %arg12: memref<8x128xf32, #tpu.memory_space<vmem>>, %arg13: memref<64x32xf32, #tpu.memory_space<vmem>>) attributes {dimension_semantics = [], scalar_prefetch = 0 : i64, scratch_operands = 1 : i64, tpu.core_type = #tpu.core_type<tc>} {
    %cst = arith.constant 0.000000e+00 : f32
    %0 = vector.broadcast %cst : f32 to vector<64x32xf32>
    %c0 = arith.constant 0 : index
    %c0_0 = arith.constant 0 : index
    %1 = vector.load %arg13[%c0, %c0_0] : memref<64x32xf32, #tpu.memory_space<vmem>>, vector<64x32xf32>
    tpu.vector_store %arg13[%c0, %c0_0], %0 {strides = array<i32>} : memref<64x32xf32, #tpu.memory_space<vmem>>, vector<64x32xf32>,
    %c0_1 = arith.constant 0 : index
    %c0_2 = arith.constant 0 : index
    %2 = memref.load %arg0[%c0_1, %c0_2] : memref<2x8xi32, #tpu.memory_space<smem>>
    %3 = arith.index_cast %2 : i32 to index
    %c0_3 = arith.constant 0 : index
    %4 = vector.load %arg2[%3, %c0_3] : memref<64x32xf32, #tpu.memory_space<vmem>>, vector<1x32xf32>
    %c0_4 = arith.constant 0 : index
    %c0_5 = arith.constant 0 : index
    %5 = vector.load %arg13[%c0_4, %c0_5] : memref<64x32xf32, #tpu.memory_space<vmem>>, vector<1x32xf32>
    tpu.vector_store %arg13[%c0_4, %c0_5], %4 {strides = array<i32>} : memref<64x32xf32, #tpu.memory_space<vmem>>, vector<1x32xf32>,
    %c1 = arith.constant 1 : index
    %c0_6 = arith.constant 0 : index
    %6 = memref.load %arg0[%c1, %c0_6] : memref<2x8xi32, #tpu.memory_space<smem>>
    %7 = arith.index_cast %6 : i32 to index
    %c0_7 = arith.constant 0 : index
    %8 = vector.load %arg2[%7, %c0_7] : memref<64x32xf32, #tpu.memory_space<vmem>>, vector<1x32xf32>
    %c1_8 = arith.constant 1 : index
    %c0_9 = arith.constant 0 : index
    %9 = vector.load %arg13[%c1_8, %c0_9] : memref<64x32xf32, #tpu.memory_space<vmem>>, vector<1x32xf32>
    tpu.vector_store %arg13[%c1_8, %c0_9], %8 {strides = array<i32>} : memref<64x32xf32, #tpu.memory_space<vmem>>, vector<1x32xf32>,
    %c0_10 = arith.constant 0 : index
    %c1_11 = arith.constant 1 : index
    %10 = memref.load %arg0[%c0_10, %c1_11] : memref<2x8xi32, #tpu.memory_space<smem>>
    %11 = arith.index_cast %10 : i32 to index
    %c0_12 = arith.constant 0 : index
    %12 = vector.load %arg2[%11, %c0_12] : memref<64x32xf32, #tpu.memory_space<vmem>>, vector<1x32xf32>
    %c8 = arith.constant 8 : index
    %c0_13 = arith.constant 0 : index
    %13 = vector.load %arg13[%c8, %c0_13] : memref<64x32xf32, #tpu.memory_space<vmem>>, vector<1x32xf32>
    tpu.vector_store %arg13[%c8, %c0_13], %12 {strides = array<i32>} : memref<64x32xf32, #tpu.memory_space<vmem>>, vector<1x32xf32>,
    %c1_14 = arith.constant 1 : index
    %c1_15 = arith.constant 1 : index
    %14 = memref.load %arg0[%c1_14, %c1_15] : memref<2x8xi32, #tpu.memory_space<smem>>
    %15 = arith.index_cast %14 : i32 to index
    %c0_16 = arith.constant 0 : index
    %16 = vector.load %arg2[%15, %c0_16] : memref<64x32xf32, #tpu.memory_space<vmem>>, vector<1x32xf32>
    %c9 = arith.constant 9 : index
    %c0_17 = arith.constant 0 : index
    %17 = vector.load %arg13[%c9, %c0_17] : memref<64x32xf32, #tpu.memory_space<vmem>>, vector<1x32xf32>
    tpu.vector_store %arg13[%c9, %c0_17], %16 {strides = array<i32>} : memref<64x32xf32, #tpu.memory_space<vmem>>, vector<1x32xf32>,
    %c0_18 = arith.constant 0 : index
    %c2 = arith.constant 2 : index
    %18 = memref.load %arg0[%c0_18, %c2] : memref<2x8xi32, #tpu.memory_space<smem>>
    %19 = arith.index_cast %18 : i32 to index
    %c0_19 = arith.constant 0 : index
    %20 = vector.load %arg2[%19, %c0_19] : memref<64x32xf32, #tpu.memory_space<vmem>>, vector<1x32xf32>
    %c16 = arith.constant 16 : index
    %c0_20 = arith.constant 0 : index
    %21 = vector.load %arg13[%c16, %c0_20] : memref<64x32xf32, #tpu.memory_space<vmem>>, vector<1x32xf32>
    tpu.vector_store %arg13[%c16, %c0_20], %20 {strides = array<i32>} : memref<64x32xf32, #tpu.memory_space<vmem>>, vector<1x32xf32>,
    %c1_21 = arith.constant 1 : index
    %c2_22 = arith.constant 2 : index
    %22 = memref.load %arg0[%c1_21, %c2_22] : memref<2x8xi32, #tpu.memory_space<smem>>
    %23 = arith.index_cast %22 : i32 to index
    %c0_23 = arith.constant 0 : index
    %24 = vector.load %arg2[%23, %c0_23] : memref<64x32xf32, #tpu.memory_space<vmem>>, vector<1x32xf32>
    %c17 = arith.constant 17 : index
    %c0_24 = arith.constant 0 : index
    %25 = vector.load %arg13[%c17, %c0_24] : memref<64x32xf32, #tpu.memory_space<vmem>>, vector<1x32xf32>
    tpu.vector_store %arg13[%c17, %c0_24], %24 {strides = array<i32>} : memref<64x32xf32, #tpu.memory_space<vmem>>, vector<1x32xf32>,
    %c0_25 = arith.constant 0 : index
    %c3 = arith.constant 3 : index
    %26 = memref.load %arg0[%c0_25, %c3] : memref<2x8xi32, #tpu.memory_space<smem>>
    %27 = arith.index_cast %26 : i32 to index
    %c0_26 = arith.constant 0 : index
    %28 = vector.load %arg2[%27, %c0_26] : memref<64x32xf32, #tpu.memory_space<vmem>>, vector<1x32xf32>
    %c24 = arith.constant 24 : index
    %c0_27 = arith.constant 0 : index
    %29 = vector.load %arg13[%c24, %c0_27] : memref<64x32xf32, #tpu.memory_space<vmem>>, vector<1x32xf32>
    tpu.vector_store %arg13[%c24, %c0_27], %28 {strides = array<i32>} : memref<64x32xf32, #tpu.memory_space<vmem>>, vector<1x32xf32>,
    %c1_28 = arith.constant 1 : index
    %c3_29 = arith.constant 3 : index
    %30 = memref.load %arg0[%c1_28, %c3_29] : memref<2x8xi32, #tpu.memory_space<smem>>
    %31 = arith.index_cast %30 : i32 to index
    %c0_30 = arith.constant 0 : index
    %32 = vector.load %arg2[%31, %c0_30] : memref<64x32xf32, #tpu.memory_space<vmem>>, vector<1x32xf32>
    %c25 = arith.constant 25 : index
    %c0_31 = arith.constant 0 : index
    %33 = vector.load %arg13[%c25, %c0_31] : memref<64x32xf32, #tpu.memory_space<vmem>>, vector<1x32xf32>
    tpu.vector_store %arg13[%c25, %c0_31], %32 {strides = array<i32>} : memref<64x32xf32, #tpu.memory_space<vmem>>, vector<1x32xf32>,
    %c0_32 = arith.constant 0 : index
    %c4 = arith.constant 4 : index
    %34 = memref.load %arg0[%c0_32, %c4] : memref<2x8xi32, #tpu.memory_space<smem>>
    %35 = arith.index_cast %34 : i32 to index
    %c0_33 = arith.constant 0 : index
    %36 = vector.load %arg2[%35, %c0_33] : memref<64x32xf32, #tpu.memory_space<vmem>>, vector<1x32xf32>
    %c32 = arith.constant 32 : index
    %c0_34 = arith.constant 0 : index
    %37 = vector.load %arg13[%c32, %c0_34] : memref<64x32xf32, #tpu.memory_space<vmem>>, vector<1x32xf32>
    tpu.vector_store %arg13[%c32, %c0_34], %36 {strides = array<i32>} : memref<64x32xf32, #tpu.memory_space<vmem>>, vector<1x32xf32>,
    %c1_35 = arith.constant 1 : index
    %c4_36 = arith.constant 4 : index
    %38 = memref.load %arg0[%c1_35, %c4_36] : memref<2x8xi32, #tpu.memory_space<smem>>
    %39 = arith.index_cast %38 : i32 to index
    %c0_37 = arith.constant 0 : index
    %40 = vector.load %arg2[%39, %c0_37] : memref<64x32xf32, #tpu.memory_space<vmem>>, vector<1x32xf32>
    %c33 = arith.constant 33 : index
    %c0_38 = arith.constant 0 : index
    %41 = vector.load %arg13[%c33, %c0_38] : memref<64x32xf32, #tpu.memory_space<vmem>>, vector<1x32xf32>
    tpu.vector_store %arg13[%c33, %c0_38], %40 {strides = array<i32>} : memref<64x32xf32, #tpu.memory_space<vmem>>, vector<1x32xf32>,
    %c0_39 = arith.constant 0 : index
    %c5 = arith.constant 5 : index
    %42 = memref.load %arg0[%c0_39, %c5] : memref<2x8xi32, #tpu.memory_space<smem>>
    %43 = arith.index_cast %42 : i32 to index
    %c0_40 = arith.constant 0 : index
    %44 = vector.load %arg2[%43, %c0_40] : memref<64x32xf32, #tpu.memory_space<vmem>>, vector<1x32xf32>
    %c40 = arith.constant 40 : index
    %c0_41 = arith.constant 0 : index
    %45 = vector.load %arg13[%c40, %c0_41] : memref<64x32xf32, #tpu.memory_space<vmem>>, vector<1x32xf32>
    tpu.vector_store %arg13[%c40, %c0_41], %44 {strides = array<i32>} : memref<64x32xf32, #tpu.memory_space<vmem>>, vector<1x32xf32>,
    %c1_42 = arith.constant 1 : index
    %c5_43 = arith.constant 5 : index
    %46 = memref.load %arg0[%c1_42, %c5_43] : memref<2x8xi32, #tpu.memory_space<smem>>
    %47 = arith.index_cast %46 : i32 to index
    %c0_44 = arith.constant 0 : index
    %48 = vector.load %arg2[%47, %c0_44] : memref<64x32xf32, #tpu.memory_space<vmem>>, vector<1x32xf32>
    %c41 = arith.constant 41 : index
    %c0_45 = arith.constant 0 : index
    %49 = vector.load %arg13[%c41, %c0_45] : memref<64x32xf32, #tpu.memory_space<vmem>>, vector<1x32xf32>
    tpu.vector_store %arg13[%c41, %c0_45], %48 {strides = array<i32>} : memref<64x32xf32, #tpu.memory_space<vmem>>, vector<1x32xf32>,
    %c0_46 = arith.constant 0 : index
    %c6 = arith.constant 6 : index
    %50 = memref.load %arg0[%c0_46, %c6] : memref<2x8xi32, #tpu.memory_space<smem>>
    %51 = arith.index_cast %50 : i32 to index
    %c0_47 = arith.constant 0 : index
    %52 = vector.load %arg2[%51, %c0_47] : memref<64x32xf32, #tpu.memory_space<vmem>>, vector<1x32xf32>
    %c48 = arith.constant 48 : index
    %c0_48 = arith.constant 0 : index
    %53 = vector.load %arg13[%c48, %c0_48] : memref<64x32xf32, #tpu.memory_space<vmem>>, vector<1x32xf32>
    tpu.vector_store %arg13[%c48, %c0_48], %52 {strides = array<i32>} : memref<64x32xf32, #tpu.memory_space<vmem>>, vector<1x32xf32>,
    %c1_49 = arith.constant 1 : index
    %c6_50 = arith.constant 6 : index
    %54 = memref.load %arg0[%c1_49, %c6_50] : memref<2x8xi32, #tpu.memory_space<smem>>
    %55 = arith.index_cast %54 : i32 to index
    %c0_51 = arith.constant 0 : index
    %56 = vector.load %arg2[%55, %c0_51] : memref<64x32xf32, #tpu.memory_space<vmem>>, vector<1x32xf32>
    %c49 = arith.constant 49 : index
    %c0_52 = arith.constant 0 : index
    %57 = vector.load %arg13[%c49, %c0_52] : memref<64x32xf32, #tpu.memory_space<vmem>>, vector<1x32xf32>
    tpu.vector_store %arg13[%c49, %c0_52], %56 {strides = array<i32>} : memref<64x32xf32, #tpu.memory_space<vmem>>, vector<1x32xf32>,
    %c0_53 = arith.constant 0 : index
    %c7 = arith.constant 7 : index
    %58 = memref.load %arg0[%c0_53, %c7] : memref<2x8xi32, #tpu.memory_space<smem>>
    %59 = arith.index_cast %58 : i32 to index
    %c0_54 = arith.constant 0 : index
    %60 = vector.load %arg2[%59, %c0_54] : memref<64x32xf32, #tpu.memory_space<vmem>>, vector<1x32xf32>
    %c56 = arith.constant 56 : index
    %c0_55 = arith.constant 0 : index
    %61 = vector.load %arg13[%c56, %c0_55] : memref<64x32xf32, #tpu.memory_space<vmem>>, vector<1x32xf32>
    tpu.vector_store %arg13[%c56, %c0_55], %60 {strides = array<i32>} : memref<64x32xf32, #tpu.memory_space<vmem>>, vector<1x32xf32>,
    %c1_56 = arith.constant 1 : index
    %c7_57 = arith.constant 7 : index
    %62 = memref.load %arg0[%c1_56, %c7_57] : memref<2x8xi32, #tpu.memory_space<smem>>
    %63 = arith.index_cast %62 : i32 to index
    %c0_58 = arith.constant 0 : index
    %64 = vector.load %arg2[%63, %c0_58] : memref<64x32xf32, #tpu.memory_space<vmem>>, vector<1x32xf32>
    %c57 = arith.constant 57 : index
    %c0_59 = arith.constant 0 : index
    %65 = vector.load %arg13[%c57, %c0_59] : memref<64x32xf32, #tpu.memory_space<vmem>>, vector<1x32xf32>
    tpu.vector_store %arg13[%c57, %c0_59], %64 {strides = array<i32>} : memref<64x32xf32, #tpu.memory_space<vmem>>, vector<1x32xf32>,
    %c0_60 = arith.constant 0 : index
    %c0_61 = arith.constant 0 : index
    %66 = vector.load %arg13[%c0_60, %c0_61] : memref<64x32xf32, #tpu.memory_space<vmem>>, vector<64x32xf32>
    %c0_62 = arith.constant 0 : index
    %c0_63 = arith.constant 0 : index
    %67 = vector.load %arg3[%c0_62, %c0_63] : memref<32x128xf32, #tpu.memory_space<vmem>>, vector<32x128xf32>
    %cst_64 = arith.constant dense<0.000000e+00> : vector<64x128xf32>
    %68 = tpu.matmul %66, %67, %cst_64 {dimension_numbers = #tpu.dot_dimension_numbers<[1], [0], [0], [1], [0, 0, 1, 1], [], []>} : vector<64x32xf32>, vector<32x128xf32>, vector<64x128xf32> -> vector<64x128xf32>
    %c0_65 = arith.constant 0 : index
    %c0_66 = arith.constant 0 : index
    %69 = vector.load %arg5[%c0_65, %c0_66] : memref<1x128xf32, #tpu.memory_space<vmem>>, vector<1x128xf32>
    %70 = vector.broadcast %69 : vector<1x128xf32> to vector<64x128xf32>
    %71 = arith.addf %68, %70 : vector<64x128xf32>
    %c0_67 = arith.constant 0 : index
    %c0_68 = arith.constant 0 : index
    %72 = vector.load %arg4[%c0_67, %c0_68] : memref<32x128xf32, #tpu.memory_space<vmem>>, vector<32x128xf32>
    %c0_69 = arith.constant 0 : index
    %c0_70 = arith.constant 0 : index
    %c0_71 = arith.constant 0 : index
    %73 = vector.load %arg1[%c0_69, %c0_70, %c0_71] : memref<2x8x32xf32, #tpu.memory_space<vmem>>, vector<1x8x32xf32>
    %74 = vector.shape_cast %73 : vector<1x8x32xf32> to vector<8x32xf32>
    %c1_72 = arith.constant 1 : index
    %c0_73 = arith.constant 0 : index
    %c0_74 = arith.constant 0 : index
    %75 = vector.load %arg1[%c1_72, %c0_73, %c0_74] : memref<2x8x32xf32, #tpu.memory_space<vmem>>, vector<1x8x32xf32>
    %76 = vector.shape_cast %75 : vector<1x8x32xf32> to vector<8x32xf32>
    %77 = vector.extract_strided_slice %71 {offsets = [0, 0], sizes = [8, 128], strides = [1, 1]} : vector<64x128xf32> to vector<8x128xf32>
    %cst_75 = arith.constant dense<0.000000e+00> : vector<8x128xf32>
    %78 = tpu.matmul %74, %72, %cst_75 {dimension_numbers = #tpu.dot_dimension_numbers<[1], [0], [0], [1], [0, 0, 1, 1], [], []>} : vector<8x32xf32>, vector<32x128xf32>, vector<8x128xf32> -> vector<8x128xf32>
    %79 = arith.addf %77, %78 : vector<8x128xf32>
    %80 = arith.negf %79 : vector<8x128xf32>
    %81 = math.exp %80 : vector<8x128xf32>
    %cst_76 = arith.constant 1.000000e+00 : f32
    %82 = vector.broadcast %cst_76 : f32 to vector<8x128xf32>
    %83 = arith.addf %82, %81 : vector<8x128xf32>
    %84 = arith.divf %82, %83 : vector<8x128xf32>
    %85 = math.tanh %79 : vector<8x128xf32>
    %86 = vector.extract_strided_slice %84 {offsets = [0, 0], sizes = [8, 32], strides = [1, 1]} : vector<8x128xf32> to vector<8x32xf32>
    %87 = vector.extract_strided_slice %84 {offsets = [0, 32], sizes = [8, 32], strides = [1, 1]} : vector<8x128xf32> to vector<8x32xf32>
    %88 = vector.extract_strided_slice %84 {offsets = [0, 96], sizes = [8, 32], strides = [1, 1]} : vector<8x128xf32> to vector<8x32xf32>
    %89 = vector.extract_strided_slice %85 {offsets = [0, 64], sizes = [8, 32], strides = [1, 1]} : vector<8x128xf32> to vector<8x32xf32>
    %90 = arith.mulf %87, %76 : vector<8x32xf32>
    %91 = arith.mulf %86, %89 : vector<8x32xf32>
    %92 = arith.addf %90, %91 : vector<8x32xf32>
    %93 = math.tanh %92 : vector<8x32xf32>
    %94 = arith.mulf %88, %93 : vector<8x32xf32>
    %c0_77 = arith.constant 0 : index
    %c0_78 = arith.constant 0 : index
    %95 = vector.load %arg10[%c0_77, %c0_78] : memref<8x256xf32, #tpu.memory_space<vmem>>, vector<8x32xf32>
    tpu.vector_store %arg10[%c0_77, %c0_78], %94 {strides = array<i32>} : memref<8x256xf32, #tpu.memory_space<vmem>>, vector<8x32xf32>,
    %96 = vector.extract_strided_slice %71 {offsets = [8, 0], sizes = [8, 128], strides = [1, 1]} : vector<64x128xf32> to vector<8x128xf32>
    %cst_79 = arith.constant dense<0.000000e+00> : vector<8x128xf32>
    %97 = tpu.matmul %94, %72, %cst_79 {dimension_numbers = #tpu.dot_dimension_numbers<[1], [0], [0], [1], [0, 0, 1, 1], [], []>} : vector<8x32xf32>, vector<32x128xf32>, vector<8x128xf32> -> vector<8x128xf32>
    %98 = arith.addf %96, %97 : vector<8x128xf32>
    %99 = arith.negf %98 : vector<8x128xf32>
    %100 = math.exp %99 : vector<8x128xf32>
    %cst_80 = arith.constant 1.000000e+00 : f32
    %101 = vector.broadcast %cst_80 : f32 to vector<8x128xf32>
    %102 = arith.addf %101, %100 : vector<8x128xf32>
    %103 = arith.divf %101, %102 : vector<8x128xf32>
    %104 = math.tanh %98 : vector<8x128xf32>
    %105 = vector.extract_strided_slice %103 {offsets = [0, 0], sizes = [8, 32], strides = [1, 1]} : vector<8x128xf32> to vector<8x32xf32>
    %106 = vector.extract_strided_slice %103 {offsets = [0, 32], sizes = [8, 32], strides = [1, 1]} : vector<8x128xf32> to vector<8x32xf32>
    %107 = vector.extract_strided_slice %103 {offsets = [0, 96], sizes = [8, 32], strides = [1, 1]} : vector<8x128xf32> to vector<8x32xf32>
    %108 = vector.extract_strided_slice %104 {offsets = [0, 64], sizes = [8, 32], strides = [1, 1]} : vector<8x128xf32> to vector<8x32xf32>
    %109 = arith.mulf %106, %92 : vector<8x32xf32>
    %110 = arith.mulf %105, %108 : vector<8x32xf32>
    %111 = arith.addf %109, %110 : vector<8x32xf32>
    %112 = math.tanh %111 : vector<8x32xf32>
    %113 = arith.mulf %107, %112 : vector<8x32xf32>
    %c0_81 = arith.constant 0 : index
    %c32_82 = arith.constant 32 : index
    %114 = vector.load %arg10[%c0_81, %c32_82] : memref<8x256xf32, #tpu.memory_space<vmem>>, vector<8x32xf32>
    tpu.vector_store %arg10[%c0_81, %c32_82], %113 {strides = array<i32>} : memref<8x256xf32, #tpu.memory_space<vmem>>, vector<8x32xf32>,
    %115 = vector.extract_strided_slice %71 {offsets = [16, 0], sizes = [8, 128], strides = [1, 1]} : vector<64x128xf32> to vector<8x128xf32>
    %cst_83 = arith.constant dense<0.000000e+00> : vector<8x128xf32>
    %116 = tpu.matmul %113, %72, %cst_83 {dimension_numbers = #tpu.dot_dimension_numbers<[1], [0], [0], [1], [0, 0, 1, 1], [], []>} : vector<8x32xf32>, vector<32x128xf32>, vector<8x128xf32> -> vector<8x128xf32>
    %117 = arith.addf %115, %116 : vector<8x128xf32>
    %118 = arith.negf %117 : vector<8x128xf32>
    %119 = math.exp %118 : vector<8x128xf32>
    %cst_84 = arith.constant 1.000000e+00 : f32
    %120 = vector.broadcast %cst_84 : f32 to vector<8x128xf32>
    %121 = arith.addf %120, %119 : vector<8x128xf32>
    %122 = arith.divf %120, %121 : vector<8x128xf32>
    %123 = math.tanh %117 : vector<8x128xf32>
    %124 = vector.extract_strided_slice %122 {offsets = [0, 0], sizes = [8, 32], strides = [1, 1]} : vector<8x128xf32> to vector<8x32xf32>
    %125 = vector.extract_strided_slice %122 {offsets = [0, 32], sizes = [8, 32], strides = [1, 1]} : vector<8x128xf32> to vector<8x32xf32>
    %126 = vector.extract_strided_slice %122 {offsets = [0, 96], sizes = [8, 32], strides = [1, 1]} : vector<8x128xf32> to vector<8x32xf32>
    %127 = vector.extract_strided_slice %123 {offsets = [0, 64], sizes = [8, 32], strides = [1, 1]} : vector<8x128xf32> to vector<8x32xf32>
    %128 = arith.mulf %125, %111 : vector<8x32xf32>
    %129 = arith.mulf %124, %127 : vector<8x32xf32>
    %130 = arith.addf %128, %129 : vector<8x32xf32>
    %131 = math.tanh %130 : vector<8x32xf32>
    %132 = arith.mulf %126, %131 : vector<8x32xf32>
    %c0_85 = arith.constant 0 : index
    %c64 = arith.constant 64 : index
    %133 = vector.load %arg10[%c0_85, %c64] : memref<8x256xf32, #tpu.memory_space<vmem>>, vector<8x32xf32>
    tpu.vector_store %arg10[%c0_85, %c64], %132 {strides = array<i32>} : memref<8x256xf32, #tpu.memory_space<vmem>>, vector<8x32xf32>,
    %134 = vector.extract_strided_slice %71 {offsets = [24, 0], sizes = [8, 128], strides = [1, 1]} : vector<64x128xf32> to vector<8x128xf32>
    %cst_86 = arith.constant dense<0.000000e+00> : vector<8x128xf32>
    %135 = tpu.matmul %132, %72, %cst_86 {dimension_numbers = #tpu.dot_dimension_numbers<[1], [0], [0], [1], [0, 0, 1, 1], [], []>} : vector<8x32xf32>, vector<32x128xf32>, vector<8x128xf32> -> vector<8x128xf32>
    %136 = arith.addf %134, %135 : vector<8x128xf32>
    %137 = arith.negf %136 : vector<8x128xf32>
    %138 = math.exp %137 : vector<8x128xf32>
    %cst_87 = arith.constant 1.000000e+00 : f32
    %139 = vector.broadcast %cst_87 : f32 to vector<8x128xf32>
    %140 = arith.addf %139, %138 : vector<8x128xf32>
    %141 = arith.divf %139, %140 : vector<8x128xf32>
    %142 = math.tanh %136 : vector<8x128xf32>
    %143 = vector.extract_strided_slice %141 {offsets = [0, 0], sizes = [8, 32], strides = [1, 1]} : vector<8x128xf32> to vector<8x32xf32>
    %144 = vector.extract_strided_slice %141 {offsets = [0, 32], sizes = [8, 32], strides = [1, 1]} : vector<8x128xf32> to vector<8x32xf32>
    %145 = vector.extract_strided_slice %141 {offsets = [0, 96], sizes = [8, 32], strides = [1, 1]} : vector<8x128xf32> to vector<8x32xf32>
    %146 = vector.extract_strided_slice %142 {offsets = [0, 64], sizes = [8, 32], strides = [1, 1]} : vector<8x128xf32> to vector<8x32xf32>
    %147 = arith.mulf %144, %130 : vector<8x32xf32>
    %148 = arith.mulf %143, %146 : vector<8x32xf32>
    %149 = arith.addf %147, %148 : vector<8x32xf32>
    %150 = math.tanh %149 : vector<8x32xf32>
    %151 = arith.mulf %145, %150 : vector<8x32xf32>
    %c0_88 = arith.constant 0 : index
    %c96 = arith.constant 96 : index
    %152 = vector.load %arg10[%c0_88, %c96] : memref<8x256xf32, #tpu.memory_space<vmem>>, vector<8x32xf32>
    tpu.vector_store %arg10[%c0_88, %c96], %151 {strides = array<i32>} : memref<8x256xf32, #tpu.memory_space<vmem>>, vector<8x32xf32>,
    %153 = vector.extract_strided_slice %71 {offsets = [32, 0], sizes = [8, 128], strides = [1, 1]} : vector<64x128xf32> to vector<8x128xf32>
    %cst_89 = arith.constant dense<0.000000e+00> : vector<8x128xf32>
    %154 = tpu.matmul %151, %72, %cst_89 {dimension_numbers = #tpu.dot_dimension_numbers<[1], [0], [0], [1], [0, 0, 1, 1], [], []>} : vector<8x32xf32>, vector<32x128xf32>, vector<8x128xf32> -> vector<8x128xf32>
    %155 = arith.addf %153, %154 : vector<8x128xf32>
    %156 = arith.negf %155 : vector<8x128xf32>
    %157 = math.exp %156 : vector<8x128xf32>
    %cst_90 = arith.constant 1.000000e+00 : f32
    %158 = vector.broadcast %cst_90 : f32 to vector<8x128xf32>
    %159 = arith.addf %158, %157 : vector<8x128xf32>
    %160 = arith.divf %158, %159 : vector<8x128xf32>
    %161 = math.tanh %155 : vector<8x128xf32>
    %162 = vector.extract_strided_slice %160 {offsets = [0, 0], sizes = [8, 32], strides = [1, 1]} : vector<8x128xf32> to vector<8x32xf32>
    %163 = vector.extract_strided_slice %160 {offsets = [0, 32], sizes = [8, 32], strides = [1, 1]} : vector<8x128xf32> to vector<8x32xf32>
    %164 = vector.extract_strided_slice %160 {offsets = [0, 96], sizes = [8, 32], strides = [1, 1]} : vector<8x128xf32> to vector<8x32xf32>
    %165 = vector.extract_strided_slice %161 {offsets = [0, 64], sizes = [8, 32], strides = [1, 1]} : vector<8x128xf32> to vector<8x32xf32>
    %166 = arith.mulf %163, %149 : vector<8x32xf32>
    %167 = arith.mulf %162, %165 : vector<8x32xf32>
    %168 = arith.addf %166, %167 : vector<8x32xf32>
    %169 = math.tanh %168 : vector<8x32xf32>
    %170 = arith.mulf %164, %169 : vector<8x32xf32>
    %c0_91 = arith.constant 0 : index
    %c128 = arith.constant 128 : index
    %171 = vector.load %arg10[%c0_91, %c128] : memref<8x256xf32, #tpu.memory_space<vmem>>, vector<8x32xf32>
    tpu.vector_store %arg10[%c0_91, %c128], %170 {strides = array<i32>} : memref<8x256xf32, #tpu.memory_space<vmem>>, vector<8x32xf32>,
    %172 = vector.extract_strided_slice %71 {offsets = [40, 0], sizes = [8, 128], strides = [1, 1]} : vector<64x128xf32> to vector<8x128xf32>
    %cst_92 = arith.constant dense<0.000000e+00> : vector<8x128xf32>
    %173 = tpu.matmul %170, %72, %cst_92 {dimension_numbers = #tpu.dot_dimension_numbers<[1], [0], [0], [1], [0, 0, 1, 1], [], []>} : vector<8x32xf32>, vector<32x128xf32>, vector<8x128xf32> -> vector<8x128xf32>
    %174 = arith.addf %172, %173 : vector<8x128xf32>
    %175 = arith.negf %174 : vector<8x128xf32>
    %176 = math.exp %175 : vector<8x128xf32>
    %cst_93 = arith.constant 1.000000e+00 : f32
    %177 = vector.broadcast %cst_93 : f32 to vector<8x128xf32>
    %178 = arith.addf %177, %176 : vector<8x128xf32>
    %179 = arith.divf %177, %178 : vector<8x128xf32>
    %180 = math.tanh %174 : vector<8x128xf32>
    %181 = vector.extract_strided_slice %179 {offsets = [0, 0], sizes = [8, 32], strides = [1, 1]} : vector<8x128xf32> to vector<8x32xf32>
    %182 = vector.extract_strided_slice %179 {offsets = [0, 32], sizes = [8, 32], strides = [1, 1]} : vector<8x128xf32> to vector<8x32xf32>
    %183 = vector.extract_strided_slice %179 {offsets = [0, 96], sizes = [8, 32], strides = [1, 1]} : vector<8x128xf32> to vector<8x32xf32>
    %184 = vector.extract_strided_slice %180 {offsets = [0, 64], sizes = [8, 32], strides = [1, 1]} : vector<8x128xf32> to vector<8x32xf32>
    %185 = arith.mulf %182, %168 : vector<8x32xf32>
    %186 = arith.mulf %181, %184 : vector<8x32xf32>
    %187 = arith.addf %185, %186 : vector<8x32xf32>
    %188 = math.tanh %187 : vector<8x32xf32>
    %189 = arith.mulf %183, %188 : vector<8x32xf32>
    %c0_94 = arith.constant 0 : index
    %c160 = arith.constant 160 : index
    %190 = vector.load %arg10[%c0_94, %c160] : memref<8x256xf32, #tpu.memory_space<vmem>>, vector<8x32xf32>
    tpu.vector_store %arg10[%c0_94, %c160], %189 {strides = array<i32>} : memref<8x256xf32, #tpu.memory_space<vmem>>, vector<8x32xf32>,
    %191 = vector.extract_strided_slice %71 {offsets = [48, 0], sizes = [8, 128], strides = [1, 1]} : vector<64x128xf32> to vector<8x128xf32>
    %cst_95 = arith.constant dense<0.000000e+00> : vector<8x128xf32>
    %192 = tpu.matmul %189, %72, %cst_95 {dimension_numbers = #tpu.dot_dimension_numbers<[1], [0], [0], [1], [0, 0, 1, 1], [], []>} : vector<8x32xf32>, vector<32x128xf32>, vector<8x128xf32> -> vector<8x128xf32>
    %193 = arith.addf %191, %192 : vector<8x128xf32>
    %194 = arith.negf %193 : vector<8x128xf32>
    %195 = math.exp %194 : vector<8x128xf32>
    %cst_96 = arith.constant 1.000000e+00 : f32
    %196 = vector.broadcast %cst_96 : f32 to vector<8x128xf32>
    %197 = arith.addf %196, %195 : vector<8x128xf32>
    %198 = arith.divf %196, %197 : vector<8x128xf32>
    %199 = math.tanh %193 : vector<8x128xf32>
    %200 = vector.extract_strided_slice %198 {offsets = [0, 0], sizes = [8, 32], strides = [1, 1]} : vector<8x128xf32> to vector<8x32xf32>
    %201 = vector.extract_strided_slice %198 {offsets = [0, 32], sizes = [8, 32], strides = [1, 1]} : vector<8x128xf32> to vector<8x32xf32>
    %202 = vector.extract_strided_slice %198 {offsets = [0, 96], sizes = [8, 32], strides = [1, 1]} : vector<8x128xf32> to vector<8x32xf32>
    %203 = vector.extract_strided_slice %199 {offsets = [0, 64], sizes = [8, 32], strides = [1, 1]} : vector<8x128xf32> to vector<8x32xf32>
    %204 = arith.mulf %201, %187 : vector<8x32xf32>
    %205 = arith.mulf %200, %203 : vector<8x32xf32>
    %206 = arith.addf %204, %205 : vector<8x32xf32>
    %207 = math.tanh %206 : vector<8x32xf32>
    %208 = arith.mulf %202, %207 : vector<8x32xf32>
    %c0_97 = arith.constant 0 : index
    %c192 = arith.constant 192 : index
    %209 = vector.load %arg10[%c0_97, %c192] : memref<8x256xf32, #tpu.memory_space<vmem>>, vector<8x32xf32>
    tpu.vector_store %arg10[%c0_97, %c192], %208 {strides = array<i32>} : memref<8x256xf32, #tpu.memory_space<vmem>>, vector<8x32xf32>,
    %210 = vector.extract_strided_slice %71 {offsets = [56, 0], sizes = [8, 128], strides = [1, 1]} : vector<64x128xf32> to vector<8x128xf32>
    %cst_98 = arith.constant dense<0.000000e+00> : vector<8x128xf32>
    %211 = tpu.matmul %208, %72, %cst_98 {dimension_numbers = #tpu.dot_dimension_numbers<[1], [0], [0], [1], [0, 0, 1, 1], [], []>} : vector<8x32xf32>, vector<32x128xf32>, vector<8x128xf32> -> vector<8x128xf32>
    %212 = arith.addf %210, %211 : vector<8x128xf32>
    %213 = arith.negf %212 : vector<8x128xf32>
    %214 = math.exp %213 : vector<8x128xf32>
    %cst_99 = arith.constant 1.000000e+00 : f32
    %215 = vector.broadcast %cst_99 : f32 to vector<8x128xf32>
    %216 = arith.addf %215, %214 : vector<8x128xf32>
    %217 = arith.divf %215, %216 : vector<8x128xf32>
    %218 = math.tanh %212 : vector<8x128xf32>
    %219 = vector.extract_strided_slice %217 {offsets = [0, 0], sizes = [8, 32], strides = [1, 1]} : vector<8x128xf32> to vector<8x32xf32>
    %220 = vector.extract_strided_slice %217 {offsets = [0, 32], sizes = [8, 32], strides = [1, 1]} : vector<8x128xf32> to vector<8x32xf32>
    %221 = vector.extract_strided_slice %217 {offsets = [0, 96], sizes = [8, 32], strides = [1, 1]} : vector<8x128xf32> to vector<8x32xf32>
    %222 = vector.extract_strided_slice %218 {offsets = [0, 64], sizes = [8, 32], strides = [1, 1]} : vector<8x128xf32> to vector<8x32xf32>
    %223 = arith.mulf %220, %206 : vector<8x32xf32>
    %224 = arith.mulf %219, %222 : vector<8x32xf32>
    %225 = arith.addf %223, %224 : vector<8x32xf32>
    %226 = math.tanh %225 : vector<8x32xf32>
    %227 = arith.mulf %221, %226 : vector<8x32xf32>
    %c0_100 = arith.constant 0 : index
    %c224 = arith.constant 224 : index
    %228 = vector.load %arg10[%c0_100, %c224] : memref<8x256xf32, #tpu.memory_space<vmem>>, vector<8x32xf32>
    tpu.vector_store %arg10[%c0_100, %c224], %227 {strides = array<i32>} : memref<8x256xf32, #tpu.memory_space<vmem>>, vector<8x32xf32>,
    %c0_101 = arith.constant 0 : index
    %c0_102 = arith.constant 0 : index
    %c0_103 = arith.constant 0 : index
    %229 = vector.load %arg11[%c0_101, %c0_102, %c0_103] : memref<2x8x32xf32, #tpu.memory_space<vmem>>, vector<1x8x32xf32>
    %230 = vector.shape_cast %229 : vector<1x8x32xf32> to vector<8x32xf32>
    %231 = vector.shape_cast %227 : vector<8x32xf32> to vector<1x8x32xf32>
    tpu.vector_store %arg11[%c0_101, %c0_102, %c0_103], %231 {strides = array<i32>} : memref<2x8x32xf32, #tpu.memory_space<vmem>>, vector<1x8x32xf32>,
    %c1_104 = arith.constant 1 : index
    %c0_105 = arith.constant 0 : index
    %c0_106 = arith.constant 0 : index
    %232 = vector.load %arg11[%c1_104, %c0_105, %c0_106] : memref<2x8x32xf32, #tpu.memory_space<vmem>>, vector<1x8x32xf32>
    %233 = vector.shape_cast %232 : vector<1x8x32xf32> to vector<8x32xf32>
    %234 = vector.shape_cast %225 : vector<8x32xf32> to vector<1x8x32xf32>
    tpu.vector_store %arg11[%c1_104, %c0_105, %c0_106], %234 {strides = array<i32>} : memref<2x8x32xf32, #tpu.memory_space<vmem>>, vector<1x8x32xf32>,
    %c0_107 = arith.constant 0 : index
    %c0_108 = arith.constant 0 : index
    %c0_109 = arith.constant 0 : index
    %235 = vector.load %arg6[%c0_107, %c0_108, %c0_109] : memref<8x12x32xf32, #tpu.memory_space<vmem>>, vector<8x12x32xf32>
    %236 = vector.shape_cast %227 : vector<8x32xf32> to vector<8x1x32xf32>
    %237 = vector.broadcast %236 : vector<8x1x32xf32> to vector<8x12x32xf32>
    %238 = arith.mulf %235, %237 : vector<8x12x32xf32>
    %cst_110 = arith.constant dense<0.000000e+00> : vector<8x12xf32>
    %239 = vector.multi_reduction <add>, %238, %cst_110 [2] : vector<8x12x32xf32> to vector<8x12xf32>
    %cst_111 = arith.constant dense<0xFF800000> : vector<8xf32>
    %240 = vector.multi_reduction <maximumf>, %239, %cst_111 [1] : vector<8x12xf32> to vector<8xf32>
    %241 = vector.shape_cast %240 : vector<8xf32> to vector<8x1xf32>
    %242 = vector.broadcast %241 : vector<8x1xf32> to vector<8x12xf32>
    %243 = arith.subf %239, %242 : vector<8x12xf32>
    %244 = math.exp %243 : vector<8x12xf32>
    %cst_112 = arith.constant dense<0.000000e+00> : vector<8xf32>
    %245 = vector.multi_reduction <add>, %244, %cst_112 [1] : vector<8x12xf32> to vector<8xf32>
    %246 = vector.shape_cast %245 : vector<8xf32> to vector<8x1xf32>
    %247 = math.log %246 : vector<8x1xf32>
    %248 = arith.addf %247, %241 : vector<8x1xf32>
    %249 = vector.broadcast %248 : vector<8x1xf32> to vector<8x12xf32>
    %250 = arith.subf %239, %249 : vector<8x12xf32>
    %251 = vector.shape_cast %250 : vector<8x12xf32> to vector<8x12x1xf32>
    %252 = vector.broadcast %251 : vector<8x12x1xf32> to vector<8x12x32xf32>
    %253 = arith.mulf %252, %235 : vector<8x12x32xf32>
    %cst_113 = arith.constant dense<0.000000e+00> : vector<8x32xf32>
    %254 = vector.multi_reduction <add>, %253, %cst_113 [1] : vector<8x12x32xf32> to vector<8x32xf32>
    %c0_114 = arith.constant 0 : index
    %c0_115 = arith.constant 0 : index
    %255 = vector.load %arg7[%c0_114, %c0_115] : memref<32x128xf32, #tpu.memory_space<vmem>>, vector<32x128xf32>
    %cst_116 = arith.constant dense<0.000000e+00> : vector<8x128xf32>
    %256 = tpu.matmul %254, %255, %cst_116 {dimension_numbers = #tpu.dot_dimension_numbers<[1], [0], [0], [1], [0, 0, 1, 1], [], []>} : vector<8x32xf32>, vector<32x128xf32>, vector<8x128xf32> -> vector<8x128xf32>
    %c0_117 = arith.constant 0 : index
    %c0_118 = arith.constant 0 : index
    %257 = vector.load %arg8[%c0_117, %c0_118] : memref<32x128xf32, #tpu.memory_space<vmem>>, vector<32x128xf32>
    %cst_119 = arith.constant dense<0.000000e+00> : vector<8x128xf32>
    %258 = tpu.matmul %227, %257, %cst_119 {dimension_numbers = #tpu.dot_dimension_numbers<[1], [0], [0], [1], [0, 0, 1, 1], [], []>} : vector<8x32xf32>, vector<32x128xf32>, vector<8x128xf32> -> vector<8x128xf32>
    %259 = arith.addf %256, %258 : vector<8x128xf32>
    %c0_120 = arith.constant 0 : index
    %c0_121 = arith.constant 0 : index
    %260 = vector.load %arg9[%c0_120, %c0_121] : memref<1x128xf32, #tpu.memory_space<vmem>>, vector<1x128xf32>
    %261 = vector.broadcast %260 : vector<1x128xf32> to vector<8x128xf32>
    %262 = arith.addf %259, %261 : vector<8x128xf32>
    %cst_122 = arith.constant dense<0xFF800000> : vector<8xf32>
    %263 = vector.multi_reduction <maximumf>, %262, %cst_122 [1] : vector<8x128xf32> to vector<8xf32>
    %264 = vector.shape_cast %263 : vector<8xf32> to vector<8x1xf32>
    %265 = vector.broadcast %264 : vector<8x1xf32> to vector<8x128xf32>
    %266 = arith.subf %262, %265 : vector<8x128xf32>
    %267 = math.exp %266 : vector<8x128xf32>
    %cst_123 = arith.constant dense<0.000000e+00> : vector<8xf32>
    %268 = vector.multi_reduction <add>, %267, %cst_123 [1] : vector<8x128xf32> to vector<8xf32>
    %269 = vector.shape_cast %268 : vector<8xf32> to vector<8x1xf32>
    %270 = math.log %269 : vector<8x1xf32>
    %271 = arith.addf %270, %264 : vector<8x1xf32>
    %272 = vector.broadcast %271 : vector<8x1xf32> to vector<8x128xf32>
    %273 = arith.subf %262, %272 : vector<8x128xf32>
    %c0_124 = arith.constant 0 : index
    %c0_125 = arith.constant 0 : index
    %274 = vector.load %arg12[%c0_124, %c0_125] : memref<8x128xf32, #tpu.memory_space<vmem>>, vector<8x128xf32>
    tpu.vector_store %arg12[%c0_124, %c0_125], %273 {strides = array<i32>} : memref<8x128xf32, #tpu.memory_space<vmem>>, vector<8x128xf32>,
    return
  }
}

</mosaic_0001>

<llo_original>
// kernel: rnn_decoder_forward.1
$region0: #{rnn_decoder_forward.1}
  #allocation0 [shape = 'u32[]', space=smem, size = 0x4, offset = 0x4, fixed_abs, tag = 'smem constant byte address 0x4 - core index']
  #allocation1 [shape = 'u32[144,128]{1,0:T(1,128)}', space=vmem, size = 0x12000, scoped, tag = 'internal scratch']
  #allocation2 [shape = 'f32[64,32]{1,0:T(8,128)}', space=vmem, size = 0x8000, scoped, tag = 'scratch operand']
  %s0 = inlined_call_operand.vmem [shape: s32[2,8], index: 0, kind: input, shape index: {}]
  %s1 = inlined_call_operand.vmem [shape: f32[2,8,32], index: 1, kind: input, shape index: {}]
  %s2 = inlined_call_operand.vmem [shape: f32[64,32], index: 2, kind: input, shape index: {}]
  %s3 = inlined_call_operand.vmem [shape: f32[32,128], index: 3, kind: input, shape index: {}]
  %s4 = inlined_call_operand.vmem [shape: f32[32,128], index: 4, kind: input, shape index: {}]
  %s5 = inlined_call_operand.vmem [shape: f32[1,128], index: 5, kind: input, shape index: {}]
  %s6 = inlined_call_operand.vmem [shape: f32[8,12,32], index: 6, kind: input, shape index: {}]
  %s7 = inlined_call_operand.vmem [shape: f32[32,128], index: 7, kind: input, shape index: {}]
  %s8 = inlined_call_operand.vmem [shape: f32[32,128], index: 8, kind: input, shape index: {}]
  %s9 = inlined_call_operand.vmem [shape: f32[1,128], index: 9, kind: input, shape index: {}]
  %s10 = inlined_call_operand.vmem [shape: f32[8,256], index: 10, kind: output, shape index: {0}]
  %s11 = inlined_call_operand.vmem [shape: f32[2,8,32], index: 11, kind: output, shape index: {1}]
  %s12 = inlined_call_operand.vmem [shape: f32[8,128], index: 12, kind: output, shape index: {2}]
  %13 = xla_tuple %s10, %s11, %s12
  %s14 = sld [smem:[#allocation0]]
  $region70: #{rnn_decoder_forward.1} parent=0
    _
  %s16 = ssub.s32 1, %s14
  %s17 = scalar_select 0, %s16, %s14
  $region1: #{rnn_decoder_forward.1} parent=0
    #allocation3 [shape = 'u8[1024]{0}', space=smem, size = 0x400, scoped, tag = 'input window, operand 0, single buffered']
    #allocation4 [shape = 's32[1]{0}', space=sflag, size = 0x4, scoped, tag = 'scoped memory for rnn_decoder_forward.1']
    %18 = vsyncpa [#allocation4], 0
    // Predicated region
    $region2: #{rnn_decoder_forward.1} parent=1 // pred_check
      _
    $region3: #{rnn_decoder_forward.1} parent=1 // pred_check_branch
      %20 = sbr.rel (0) target = $region5
    $region4: #{rnn_decoder_forward.1} parent=1 // pred_region
      %s22 = ssub.s32 32, 32
      %23 = vsyncadd [#allocation4], %s22
      %s25 = sshll.u32 %s0, 4
      %s26 = int_to_ptr.vmem [resolvable:$true] %s25
      %28 = dma.vmem_to_smem %s26, 32, [#allocation3], [#allocation4]
    $region5: #{rnn_decoder_forward.1} parent=1 // pred_fallthru
      _
    // Predicated region
    $region6: #{rnn_decoder_forward.1} parent=1 // pred_check
      _
    $region7: #{rnn_decoder_forward.1} parent=1 // pred_check_branch
      %30 = sbr.rel (0) target = $region9
    $region8: #{rnn_decoder_forward.1} parent=1 // pred_region
      _
    $region9: #{rnn_decoder_forward.1} parent=1 // pred_fallthru
      _
    // Predicated region
    $region10: #{rnn_decoder_forward.1} parent=1 // pred_check
      _
    $region11: #{rnn_decoder_forward.1} parent=1 // pred_check_branch
      %32 = sbr.rel (0) target = $region13
    $region12: #{rnn_decoder_forward.1} parent=1 // pred_region
      _
    $region13: #{rnn_decoder_forward.1} parent=1 // pred_fallthru
      _
    // Predicated region
    $region14: #{rnn_decoder_forward.1} parent=1 // pred_check
      _
    $region15: #{rnn_decoder_forward.1} parent=1 // pred_check_branch
      %34 = sbr.rel (0) target = $region17
    $region16: #{rnn_decoder_forward.1} parent=1 // pred_region
      _
    $region17: #{rnn_decoder_forward.1} parent=1 // pred_fallthru
      _
    // Predicated region
    $region18: #{rnn_decoder_forward.1} parent=1 // pred_check
      _
    $region19: #{rnn_decoder_forward.1} parent=1 // pred_check_branch
      %36 = sbr.rel (0) target = $region21
    $region20: #{rnn_decoder_forward.1} parent=1 // pred_region
      _
    $region21: #{rnn_decoder_forward.1} parent=1 // pred_fallthru
      _
    // Predicated region
    $region22: #{rnn_decoder_forward.1} parent=1 // pred_check
      _
    $region23: #{rnn_decoder_forward.1} parent=1 // pred_check_branch
      %38 = sbr.rel (0) target = $region25
    $region24: #{rnn_decoder_forward.1} parent=1 // pred_region
      _
    $region25: #{rnn_decoder_forward.1} parent=1 // pred_fallthru
      _
    // Predicated region
    $region26: #{rnn_decoder_forward.1} parent=1 // pred_check
      _
    $region27: #{rnn_decoder_forward.1} parent=1 // pred_check_branch
      %40 = sbr.rel (0) target = $region29
    $region28: #{rnn_decoder_forward.1} parent=1 // pred_region
      _
    $region29: #{rnn_decoder_forward.1} parent=1 // pred_fallthru
      _
    // Predicated region
    $region30: #{rnn_decoder_forward.1} parent=1 // pred_check
      _
    $region31: #{rnn_decoder_forward.1} parent=1 // pred_check_branch
      %42 = sbr.rel (0) target = $region33
    $region32: #{rnn_decoder_forward.1} parent=1 // pred_region
      _
    $region33: #{rnn_decoder_forward.1} parent=1 // pred_fallthru
      _
    // Predicated region
    $region34: #{rnn_decoder_forward.1} parent=1 // pred_check
      _
    $region35: #{rnn_decoder_forward.1} parent=1 // pred_check_branch
      %44 = sbr.rel (0) target = $region37
    $region36: #{rnn_decoder_forward.1} parent=1 // pred_region
      _
    $region37: #{rnn_decoder_forward.1} parent=1 // pred_fallthru
      _
    // Predicated region
    $region38: #{rnn_decoder_forward.1} parent=1 // pred_check
      _
    $region39: #{rnn_decoder_forward.1} parent=1 // pred_check_branch
      %46 = sbr.rel (0) target = $region41
    $region40: #{rnn_decoder_forward.1} parent=1 // pred_region
      _
    $region41: #{rnn_decoder_forward.1} parent=1 // pred_fallthru
      _
    // Predicated region
    $region42: #{rnn_decoder_forward.1} parent=1 // pred_check
      _
    $region43: #{rnn_decoder_forward.1} parent=1 // pred_check_branch
      %48 = sbr.rel (0) target = $region45
    $region44: #{rnn_decoder_forward.1} parent=1 // pred_region
      %49 = dma.done [#allocation4], 32
    $region45: #{rnn_decoder_forward.1} parent=1 // pred_fallthru
      _
    %50 = sfence
    %vm51 = vcmask 261120
    %52 = vst.msk [vmem:[#allocation2] sm:$0xff] %vm51, 0.0
    %53 = vst.msk [vmem:[#allocation2 + $0x8] sm:$0xff] %vm51, 0.0
    %54 = vst.msk [vmem:[#allocation2 + $0x10] sm:$0xff] %vm51, 0.0
    %55 = vst.msk [vmem:[#allocation2 + $0x18] sm:$0xff] %vm51, 0.0
    %56 = vst.msk [vmem:[#allocation2 + $0x20] sm:$0xff] %vm51, 0.0
    %57 = vst.msk [vmem:[#allocation2 + $0x28] sm:$0xff] %vm51, 0.0
    %58 = vst.msk [vmem:[#allocation2 + $0x30] sm:$0xff] %vm51, 0.0
    %59 = vst.msk [vmem:[#allocation2 + $0x38] sm:$0xff] %vm51, 0.0
    %s60 = sld [smem:[#allocation3]]
    %s61 = scalar_lea.vmem %s2, %s60
    %v62 = vld [vmem:[%s61] sm:$0x1]
    %vm63 = vcmask 253952
    %64 = vst.msk [vmem:[#allocation2] sm:$0x1] %vm63, %v62
    %s65 = sld [smem:[#allocation3 + $0x80]]
    %s66 = scalar_lea.vmem %s2, %s65
    %v67 = vld [vmem:[%s66] sm:$0x1]
    %68 = vst.msk [vmem:[#allocation2 + $0x1] sm:$0x1] %vm63, %v67
    %s69 = sld [smem:[#allocation3 + $0x1]]
    %s70 = scalar_lea.vmem %s2, %s69
    %v71 = vld [vmem:[%s70] sm:$0x1]
    %72 = vst.msk [vmem:[#allocation2 + $0x8] sm:$0x1] %vm63, %v71
    %s73 = sld [smem:[#allocation3 + $0x81]]
    %s74 = scalar_lea.vmem %s2, %s73
    %v75 = vld [vmem:[%s74] sm:$0x1]
    %76 = vst.msk [vmem:[#allocation2 + $0x9] sm:$0x1] %vm63, %v75
    %s77 = sld [smem:[#allocation3 + $0x2]]
    %s78 = scalar_lea.vmem %s2, %s77
    %v79 = vld [vmem:[%s78] sm:$0x1]
    %80 = vst.msk [vmem:[#allocation2 + $0x10] sm:$0x1] %vm63, %v79
    %s81 = sld [smem:[#allocation3 + $0x82]]
    %s82 = scalar_lea.vmem %s2, %s81
    %v83 = vld [vmem:[%s82] sm:$0x1]
    %84 = vst.msk [vmem:[#allocation2 + $0x11] sm:$0x1] %vm63, %v83
    %s85 = sld [smem:[#allocation3 + $0x3]]
    %s86 = scalar_lea.vmem %s2, %s85
    %v87 = vld [vmem:[%s86] sm:$0x1]
    %88 = vst.msk [vmem:[#allocation2 + $0x18] sm:$0x1] %vm63, %v87
    %s89 = sld [smem:[#allocation3 + $0x83]]
    %s90 = scalar_lea.vmem %s2, %s89
    %v91 = vld [vmem:[%s90] sm:$0x1]
    %92 = vst.msk [vmem:[#allocation2 + $0x19] sm:$0x1] %vm63, %v91
    %s93 = sld [smem:[#allocation3 + $0x4]]
    %s94 = scalar_lea.vmem %s2, %s93
    %v95 = vld [vmem:[%s94] sm:$0x1]
    %96 = vst.msk [vmem:[#allocation2 + $0x20] sm:$0x1] %vm63, %v95
    %s97 = sld [smem:[#allocation3 + $0x84]]
    %s98 = scalar_lea.vmem %s2, %s97
    %v99 = vld [vmem:[%s98] sm:$0x1]
    %100 = vst.msk [vmem:[#allocation2 + $0x21] sm:$0x1] %vm63, %v99
    %s101 = sld [smem:[#allocation3 + $0x5]]
    %s102 = scalar_lea.vmem %s2, %s101
    %v103 = vld [vmem:[%s102] sm:$0x1]
    %104 = vst.msk [vmem:[#allocation2 + $0x28] sm:$0x1] %vm63, %v103
    %s105 = sld [smem:[#allocation3 + $0x85]]
    %s106 = scalar_lea.vmem %s2, %s105
    %v107 = vld [vmem:[%s106] sm:$0x1]
    %108 = vst.msk [vmem:[#allocation2 + $0x29] sm:$0x1] %vm63, %v107
    %s109 = sld [smem:[#allocation3 + $0x6]]
    %s110 = scalar_lea.vmem %s2, %s109
    %v111 = vld [vmem:[%s110] sm:$0x1]
    %112 = vst.msk [vmem:[#allocation2 + $0x30] sm:$0x1] %vm63, %v111
    %s113 = sld [smem:[#allocation3 + $0x86]]
    %s114 = scalar_lea.vmem %s2, %s113
    %v115 = vld [vmem:[%s114] sm:$0x1]
    %116 = vst.msk [vmem:[#allocation2 + $0x31] sm:$0x1] %vm63, %v115
    %s117 = sld [smem:[#allocation3 + $0x7]]
    %s118 = scalar_lea.vmem %s2, %s117
    %v119 = vld [vmem:[%s118] sm:$0x1]
    %120 = vst.msk [vmem:[#allocation2 + $0x38] sm:$0x1] %vm63, %v119
    %s121 = sld [smem:[#allocation3 + $0x87]]
    %s122 = scalar_lea.vmem %s2, %s121
    %v123 = vld [vmem:[%s122] sm:$0x1]
    %124 = vst.msk [vmem:[#allocation2 + $0x39] sm:$0x1] %vm63, %v123
    %v125 = vld [vmem:[#allocation2] sm:$0xff]
    %v126 = vld [vmem:[#allocation2 + $0x8] sm:$0xff]
    %v127 = vld [vmem:[#allocation2 + $0x10] sm:$0xff]
    %v128 = vld [vmem:[#allocation2 + $0x18] sm:$0xff]
    %v129 = vld [vmem:[#allocation2 + $0x20] sm:$0xff]
    %v130 = vld [vmem:[#allocation2 + $0x28] sm:$0xff]
    %v131 = vld [vmem:[#allocation2 + $0x30] sm:$0xff]
    %v132 = vld [vmem:[#allocation2 + $0x38] sm:$0xff]
    %v133 = vld [vmem:[%s3] sm:$0xff]
    %v134 = vld [vmem:[%s3 + $0x8] sm:$0xff]
    %v135 = vld [vmem:[%s3 + $0x10] sm:$0xff]
    %v136 = vld [vmem:[%s3 + $0x18] sm:$0xff]
    %v137 = vld [vmem:[%s5] sm:$0x1]
    %v139 = vlaneseq
    %v140 = vshrl.u32 %v139, 7
    %v141 = vsub.s32 0, %v140
    %v142 = vrot.slane %v137, %v141
    %v145 = vsel %vm51, %v125, 0
    %v148 = vsel %vm51, %v126, 0
    %v151 = vsel %vm51, %v127, 0
    %v154 = vsel %vm51, %v128, 0
    %v157 = vsel %vm51, %v129, 0
    %v160 = vsel %vm51, %v130, 0
    %v163 = vsel %vm51, %v131, 0
    %v166 = vsel %vm51, %v132, 0
    %168 = vmatprep.subr.mxu0 0.0
    %169 = vmatpush1.msra.mxu0 0.0
    %170 = vmatprep.subr.mxu0 0.0
    %171 = vmatpush1.msra.mxu0 0.0
    %172 = vmatprep.subr.mxu0 0.0
    %173 = vmatpush1.msra.mxu0 0.0
    %174 = vmatprep.subr.mxu0 0.0
    %175 = vmatpush1.msra.mxu0 0.0
    %176 = vmatprep.subr.mxu0 0.0
    %177 = vmatpush1.msra.mxu0 0.0
    %178 = vmatprep.subr.mxu0 0.0
    %179 = vmatpush1.msra.mxu0 0.0
    %180 = vmatprep.subr.mxu0 0.0
    %181 = vmatpush1.msra.mxu0 0.0
    %182 = vmatprep.subr.mxu0 0.0
    %183 = vmatpush1.msra.mxu0 0.0
    %184 = vmatprep.subr.mxu0 0.0
    %185 = vmatpush1.msra.mxu0 0.0
    %186 = vmatprep.subr.mxu0 0.0
    %187 = vmatpush1.msra.mxu0 0.0
    %188 = vmatprep.subr.mxu0 0.0
    %189 = vmatpush1.msra.mxu0 0.0
    %190 = vmatprep.subr.mxu0 0.0
    %191 = vmatpush1.msra.mxu0 0.0
    %192 = vmatprep.subr.mxu0 0.0
    %193 = vmatpush1.msra.mxu0 %v136
    %194 = vmatprep.subr.mxu0 0.0
    %195 = vmatpush1.msra.mxu0 %v135
    %196 = vmatprep.subr.mxu0 0.0
    %197 = vmatpush1.msra.mxu0 %v134
    %198 = vmatprep.subr.mxu0 0.0
    %199 = vmatpush1.msra.mxu0 %v133
    %200 = vmatprep.subr.mxu0 0.0
    %201 = vmatpush2.msra.mxu0 0.0
    %202 = vmatprep.subr.mxu0 0.0
    %203 = vmatpush2.msra.mxu0 0.0
    %204 = vmatprep.subr.mxu0 0.0
    %205 = vmatpush2.msra.mxu0 0.0
    %206 = vmatprep.subr.mxu0 0.0
    %207 = vmatpush2.msra.mxu0 0.0
    %208 = vmatprep.subr.mxu0 0.0
    %209 = vmatpush2.msra.mxu0 0.0
    %210 = vmatprep.subr.mxu0 0.0
    %211 = vmatpush2.msra.mxu0 0.0
    %212 = vmatprep.subr.mxu0 0.0
    %213 = vmatpush2.msra.mxu0 0.0
    %214 = vmatprep.subr.mxu0 0.0
    %215 = vmatpush2.msra.mxu0 0.0
    %216 = vmatprep.subr.mxu0 0.0
    %217 = vmatpush2.msra.mxu0 0.0
    %218 = vmatprep.subr.mxu0 0.0
    %219 = vmatpush2.msra.mxu0 0.0
    %220 = vmatprep.subr.mxu0 0.0
    %221 = vmatpush2.msra.mxu0 0.0
    %222 = vmatprep.subr.mxu0 0.0
    %223 = vmatpush2.msra.mxu0 0.0
    %224 = vmatprep.subr.mxu0 0.0
    %225 = vmatpush2.msra.mxu0 0.0
    %226 = vmatprep.subr.mxu0 0.0
    %227 = vmatpush2.msra.mxu0 0.0
    %228 = vmatprep.subr.mxu0 0.0
    %229 = vmatpush2.msra.mxu0 0.0
    %230 = vmatprep.subr.mxu0 0.0
    %231 = vmatpush2.msra.mxu0 0.0
    %232 = vmatprep.mubr.f32.mxu0 0.0
    %233 = vmatmul.mubr.f32.gmra.mxu0 %v145
    %v234 = vpop.f32.mrf.mxu0
    %v235 = vadd.f32 %v142, %v234
    %v236 = vpop.f32.mrf.mxu0
    %237 = vmatprep.mubr.f32.mxu0 0.0
    %238 = vmatmul.mubr.f32.gmra.mxu0 %v148
    %v239 = vpop.f32.mrf.mxu0
    %v240 = vadd.f32 %v142, %v239
    %v241 = vpop.f32.mrf.mxu0
    %242 = vmatprep.mubr.f32.mxu0 0.0
    %243 = vmatmul.mubr.f32.gmra.mxu0 %v151
    %v244 = vpop.f32.mrf.mxu0
    %v245 = vadd.f32 %v142, %v244
    %v246 = vpop.f32.mrf.mxu0
    %247 = vmatprep.mubr.f32.mxu0 0.0
    %248 = vmatmul.mubr.f32.gmra.mxu0 %v154
    %v249 = vpop.f32.mrf.mxu0
    %v250 = vadd.f32 %v142, %v249
    %v251 = vpop.f32.mrf.mxu0
    %252 = vmatprep.mubr.f32.mxu0 0.0
    %253 = vmatmul.mubr.f32.gmra.mxu0 %v157
    %v254 = vpop.f32.mrf.mxu0
    %v255 = vadd.f32 %v142, %v254
    %v256 = vpop.f32.mrf.mxu0
    %257 = vmatprep.mubr.f32.mxu0 0.0
    %258 = vmatmul.mubr.f32.gmra.mxu0 %v160
    %v259 = vpop.f32.mrf.mxu0
    %v260 = vadd.f32 %v142, %v259
    %v261 = vpop.f32.mrf.mxu0
    %262 = vmatprep.mubr.f32.mxu0 0.0
    %263 = vmatmul.mubr.f32.gmra.mxu0 %v163
    %v264 = vpop.f32.mrf.mxu0
    %v265 = vadd.f32 %v142, %v264
    %v266 = vpop.f32.mrf.mxu0
    %267 = vmatprep.mubr.f32.mxu0 0.0
    %268 = vmatmul.mubr.f32.gmra.mxu0 %v166
    %v269 = vpop.f32.mrf.mxu0
    %v270 = vadd.f32 %v142, %v269
    %v271 = vpop.f32.mrf.mxu0
    %272 = vdwg.mxu0
    %v273 = vld [vmem:[%s4] sm:$0xff]
    %v274 = vld [vmem:[%s4 + $0x8] sm:$0xff]
    %v275 = vld [vmem:[%s4 + $0x10] sm:$0xff]
    %v276 = vld [vmem:[%s4 + $0x18] sm:$0xff]
    %v277 = vld [vmem:[%s1] sm:$0xff]
    %s278 = scalar_lea.vmem %s1, 8
    %v279 = vld [vmem:[%s278] sm:$0xff]
    %v281 = vsel %vm51, %v277, 0
    %283 = vmatprep.subr.mxu0 0.0
    %284 = vmatpush1.msra.mxu0 0.0
    %285 = vmatprep.subr.mxu0 0.0
    %286 = vmatpush1.msra.mxu0 0.0
    %287 = vmatprep.subr.mxu0 0.0
    %288 = vmatpush1.msra.mxu0 0.0
    %289 = vmatprep.subr.mxu0 0.0
    %290 = vmatpush1.msra.mxu0 0.0
    %291 = vmatprep.subr.mxu0 0.0
    %292 = vmatpush1.msra.mxu0 0.0
    %293 = vmatprep.subr.mxu0 0.0
    %294 = vmatpush1.msra.mxu0 0.0
    %295 = vmatprep.subr.mxu0 0.0
    %296 = vmatpush1.msra.mxu0 0.0
    %297 = vmatprep.subr.mxu0 0.0
    %298 = vmatpush1.msra.mxu0 0.0
    %299 = vmatprep.subr.mxu0 0.0
    %300 = vmatpush1.msra.mxu0 0.0
    %301 = vmatprep.subr.mxu0 0.0
    %302 = vmatpush1.msra.mxu0 0.0
    %303 = vmatprep.subr.mxu0 0.0
    %304 = vmatpush1.msra.mxu0 0.0
    %305 = vmatprep.subr.mxu0 0.0
    %306 = vmatpush1.msra.mxu0 0.0
    %307 = vmatprep.subr.mxu0 0.0
    %308 = vmatpush1.msra.mxu0 %v276
    %309 = vmatprep.subr.mxu0 0.0
    %310 = vmatpush1.msra.mxu0 %v275
    %311 = vmatprep.subr.mxu0 0.0
    %312 = vmatpush1.msra.mxu0 %v274
    %313 = vmatprep.subr.mxu0 0.0
    %314 = vmatpush1.msra.mxu0 %v273
    %315 = vmatprep.subr.mxu0 0.0
    %316 = vmatpush2.msra.mxu0 0.0
    %317 = vmatprep.subr.mxu0 0.0
    %318 = vmatpush2.msra.mxu0 0.0
    %319 = vmatprep.subr.mxu0 0.0
    %320 = vmatpush2.msra.mxu0 0.0
    %321 = vmatprep.subr.mxu0 0.0
    %322 = vmatpush2.msra.mxu0 0.0
    %323 = vmatprep.subr.mxu0 0.0
    %324 = vmatpush2.msra.mxu0 0.0
    %325 = vmatprep.subr.mxu0 0.0
    %326 = vmatpush2.msra.mxu0 0.0
    %327 = vmatprep.subr.mxu0 0.0
    %328 = vmatpush2.msra.mxu0 0.0
    %329 = vmatprep.subr.mxu0 0.0
    %330 = vmatpush2.msra.mxu0 0.0
    %331 = vmatprep.subr.mxu0 0.0
    %332 = vmatpush2.msra.mxu0 0.0
    %333 = vmatprep.subr.mxu0 0.0
    %334 = vmatpush2.msra.mxu0 0.0
    %335 = vmatprep.subr.mxu0 0.0
    %336 = vmatpush2.msra.mxu0 0.0
    %337 = vmatprep.subr.mxu0 0.0
    %338 = vmatpush2.msra.mxu0 0.0
    %339 = vmatprep.subr.mxu0 0.0
    %340 = vmatpush2.msra.mxu0 0.0
    %341 = vmatprep.subr.mxu0 0.0
    %342 = vmatpush2.msra.mxu0 0.0
    %343 = vmatprep.subr.mxu0 0.0
    %344 = vmatpush2.msra.mxu0 0.0
    %345 = vmatprep.subr.mxu0 0.0
    %346 = vmatpush2.msra.mxu0 0.0
    %347 = vmatprep.mubr.f32.mxu0 0.0
    %348 = vmatmul.mubr.f32.gmra.mxu0 %v281
    %v349 = vpop.f32.mrf.mxu0
    %v350 = vadd.f32 0.0, %v349
    %v351 = vpop.f32.mrf.mxu0
    %352 = vdwg.mxu0
    %v353 = vadd.f32 %v235, %v350
    %v354 = vxor.u32 %v353, 2147483648
    %v355 = vmul.f32 %v354, 1.442695
    %v356 = vpow.pop %v355
    %v357 = vadd.f32 %v356, 1.0
    %v358 = vrcp.pop %v357
    %v359 = vmul.f32 1.0, %v358
    %v360 = vtanh.pop %v353
    %362 = vrot.lane.b32.xlu0 %v279, 32
    %v363 = vpop.permute.xlu0 %362
    %v365 = vmul.f32 %v359, %v363
    %367 = vrot.lane.b32.xlu0 %v360, 64
    %v368 = vpop.permute.xlu0 %367
    %v370 = vmul.f32 %v359, %v368
    %372 = vrot.lane.b32.xlu0 %v370, 32
    %v373 = vpop.permute.xlu0 %372
    %v375 = vadd.f32 %v365, %v373
    %v376 = vtanh.pop %v375
    %378 = vrot.lane.b32.xlu0 %v376, 64
    %v379 = vpop.permute.xlu0 %378
    %v381 = vmul.f32 %v359, %v379
    %383 = vrot.lane.b32.xlu0 %v381, 32
    %v384 = vpop.permute.xlu0 %383
    %386 = vst.msk [vmem:[%s10] sm:$0xff] %vm51, %v384
    %v387 = vsel %vm51, %v384, 0
    %389 = vmatprep.subr.mxu0 0.0
    %390 = vmatpush1.msra.mxu0 0.0
    %391 = vmatprep.subr.mxu0 0.0
    %392 = vmatpush1.msra.mxu0 0.0
    %393 = vmatprep.subr.mxu0 0.0
    %394 = vmatpush1.msra.mxu0 0.0
    %395 = vmatprep.subr.mxu0 0.0
    %396 = vmatpush1.msra.mxu0 0.0
    %397 = vmatprep.subr.mxu0 0.0
    %398 = vmatpush1.msra.mxu0 0.0
    %399 = vmatprep.subr.mxu0 0.0
    %400 = vmatpush1.msra.mxu0 0.0
    %401 = vmatprep.subr.mxu0 0.0
    %402 = vmatpush1.msra.mxu0 0.0
    %403 = vmatprep.subr.mxu0 0.0
    %404 = vmatpush1.msra.mxu0 0.0
    %405 = vmatprep.subr.mxu0 0.0
    %406 = vmatpush1.msra.mxu0 0.0
    %407 = vmatprep.subr.mxu0 0.0
    %408 = vmatpush1.msra.mxu0 0.0
    %409 = vmatprep.subr.mxu0 0.0
    %410 = vmatpush1.msra.mxu0 0.0
    %411 = vmatprep.subr.mxu0 0.0
    %412 = vmatpush1.msra.mxu0 0.0
    %413 = vmatprep.subr.mxu0 0.0
    %414 = vmatpush1.msra.mxu0 %v276
    %415 = vmatprep.subr.mxu0 0.0
    %416 = vmatpush1.msra.mxu0 %v275
    %417 = vmatprep.subr.mxu0 0.0
    %418 = vmatpush1.msra.mxu0 %v274
    %419 = vmatprep.subr.mxu0 0.0
    %420 = vmatpush1.msra.mxu0 %v273
    %421 = vmatprep.subr.mxu0 0.0
    %422 = vmatpush2.msra.mxu0 0.0
    %423 = vmatprep.subr.mxu0 0.0
    %424 = vmatpush2.msra.mxu0 0.0
    %425 = vmatprep.subr.mxu0 0.0
    %426 = vmatpush2.msra.mxu0 0.0
    %427 = vmatprep.subr.mxu0 0.0
    %428 = vmatpush2.msra.mxu0 0.0
    %429 = vmatprep.subr.mxu0 0.0
    %430 = vmatpush2.msra.mxu0 0.0
    %431 = vmatprep.subr.mxu0 0.0
    %432 = vmatpush2.msra.mxu0 0.0
    %433 = vmatprep.subr.mxu0 0.0
    %434 = vmatpush2.msra.mxu0 0.0
    %435 = vmatprep.subr.mxu0 0.0
    %436 = vmatpush2.msra.mxu0 0.0
    %437 = vmatprep.subr.mxu0 0.0
    %438 = vmatpush2.msra.mxu0 0.0
    %439 = vmatprep.subr.mxu0 0.0
    %440 = vmatpush2.msra.mxu0 0.0
    %441 = vmatprep.subr.mxu0 0.0
    %442 = vmatpush2.msra.mxu0 0.0
    %443 = vmatprep.subr.mxu0 0.0
    %444 = vmatpush2.msra.mxu0 0.0
    %445 = vmatprep.subr.mxu0 0.0
    %446 = vmatpush2.msra.mxu0 0.0
    %447 = vmatprep.subr.mxu0 0.0
    %448 = vmatpush2.msra.mxu0 0.0
    %449 = vmatprep.subr.mxu0 0.0
    %450 = vmatpush2.msra.mxu0 0.0
    %451 = vmatprep.subr.mxu0 0.0
    %452 = vmatpush2.msra.mxu0 0.0
    %453 = vmatprep.mubr.f32.mxu0 0.0
    %454 = vmatmul.mubr.f32.gmra.mxu0 %v387
    %v455 = vpop.f32.mrf.mxu0
    %v456 = vadd.f32 0.0, %v455
    %v457 = vpop.f32.mrf.mxu0
    %458 = vdwg.mxu0
    %v459 = vadd.f32 %v240, %v456
    %v460 = vxor.u32 %v459, 2147483648
    %v461 = vmul.f32 %v460, 1.442695
    %v462 = vpow.pop %v461
    %v463 = vadd.f32 %v462, 1.0
    %v464 = vrcp.pop %v463
    %v465 = vmul.f32 1.0, %v464
    %v466 = vtanh.pop %v459
    %v467 = vmul.f32 %v465, %v375
    %469 = vrot.lane.b32.xlu0 %v466, 64
    %v470 = vpop.permute.xlu0 %469
    %v472 = vmul.f32 %v465, %v470
    %474 = vrot.lane.b32.xlu0 %v472, 32
    %v475 = vpop.permute.xlu0 %474
    %v477 = vadd.f32 %v467, %v475
    %v478 = vtanh.pop %v477
    %480 = vrot.lane.b32.xlu0 %v478, 64
    %v481 = vpop.permute.xlu0 %480
    %v483 = vmul.f32 %v465, %v481
    %485 = vrot.lane.b32.xlu0 %v483, 64
    %v486 = vpop.permute.xlu0 %485
    %vm488 = vcmask 523520
    %489 = vst.msk [vmem:[%s10] sm:$0xff] %vm488, %v486
    %490 = vrot.lane.b32.xlu0 %v483, 32
    %v491 = vpop.permute.xlu0 %490
    %v492 = vsel %vm51, %v491, 0
    %494 = vmatprep.subr.mxu0 0.0
    %495 = vmatpush1.msra.mxu0 0.0
    %496 = vmatprep.subr.mxu0 0.0
    %497 = vmatpush1.msra.mxu0 0.0
    %498 = vmatprep.subr.mxu0 0.0
    %499 = vmatpush1.msra.mxu0 0.0
    %500 = vmatprep.subr.mxu0 0.0
    %501 = vmatpush1.msra.mxu0 0.0
    %502 = vmatprep.subr.mxu0 0.0
    %503 = vmatpush1.msra.mxu0 0.0
    %504 = vmatprep.subr.mxu0 0.0
    %505 = vmatpush1.msra.mxu0 0.0
    %506 = vmatprep.subr.mxu0 0.0
    %507 = vmatpush1.msra.mxu0 0.0
    %508 = vmatprep.subr.mxu0 0.0
    %509 = vmatpush1.msra.mxu0 0.0
    %510 = vmatprep.subr.mxu0 0.0
    %511 = vmatpush1.msra.mxu0 0.0
    %512 = vmatprep.subr.mxu0 0.0
    %513 = vmatpush1.msra.mxu0 0.0
    %514 = vmatprep.subr.mxu0 0.0
    %515 = vmatpush1.msra.mxu0 0.0
    %516 = vmatprep.subr.mxu0 0.0
    %517 = vmatpush1.msra.mxu0 0.0
    %518 = vmatprep.subr.mxu0 0.0
    %519 = vmatpush1.msra.mxu0 %v276
    %520 = vmatprep.subr.mxu0 0.0
    %521 = vmatpush1.msra.mxu0 %v275
    %522 = vmatprep.subr.mxu0 0.0
    %523 = vmatpush1.msra.mxu0 %v274
    %524 = vmatprep.subr.mxu0 0.0
    %525 = vmatpush1.msra.mxu0 %v273
    %526 = vmatprep.subr.mxu0 0.0
    %527 = vmatpush2.msra.mxu0 0.0
    %528 = vmatprep.subr.mxu0 0.0
    %529 = vmatpush2.msra.mxu0 0.0
    %530 = vmatprep.subr.mxu0 0.0
    %531 = vmatpush2.msra.mxu0 0.0
    %532 = vmatprep.subr.mxu0 0.0
    %533 = vmatpush2.msra.mxu0 0.0
    %534 = vmatprep.subr.mxu0 0.0
    %535 = vmatpush2.msra.mxu0 0.0
    %536 = vmatprep.subr.mxu0 0.0
    %537 = vmatpush2.msra.mxu0 0.0
    %538 = vmatprep.subr.mxu0 0.0
    %539 = vmatpush2.msra.mxu0 0.0
    %540 = vmatprep.subr.mxu0 0.0
    %541 = vmatpush2.msra.mxu0 0.0
    %542 = vmatprep.subr.mxu0 0.0
    %543 = vmatpush2.msra.mxu0 0.0
    %544 = vmatprep.subr.mxu0 0.0
    %545 = vmatpush2.msra.mxu0 0.0
    %546 = vmatprep.subr.mxu0 0.0
    %547 = vmatpush2.msra.mxu0 0.0
    %548 = vmatprep.subr.mxu0 0.0
    %549 = vmatpush2.msra.mxu0 0.0
    %550 = vmatprep.subr.mxu0 0.0
    %551 = vmatpush2.msra.mxu0 0.0
    %552 = vmatprep.subr.mxu0 0.0
    %553 = vmatpush2.msra.mxu0 0.0
    %554 = vmatprep.subr.mxu0 0.0
    %555 = vmatpush2.msra.mxu0 0.0
    %556 = vmatprep.subr.mxu0 0.0
    %557 = vmatpush2.msra.mxu0 0.0
    %558 = vmatprep.mubr.f32.mxu0 0.0
    %559 = vmatmul.mubr.f32.gmra.mxu0 %v492
    %v560 = vpop.f32.mrf.mxu0
    %v561 = vadd.f32 0.0, %v560
    %v562 = vpop.f32.mrf.mxu0
    %563 = vdwg.mxu0
    %v564 = vadd.f32 %v245, %v561
    %v565 = vxor.u32 %v564, 2147483648
    %v566 = vmul.f32 %v565, 1.442695
    %v567 = vpow.pop %v566
    %v568 = vadd.f32 %v567, 1.0
    %v569 = vrcp.pop %v568
    %v570 = vmul.f32 1.0, %v569
    %v571 = vtanh.pop %v564
    %v572 = vmul.f32 %v570, %v477
    %574 = vrot.lane.b32.xlu0 %v571, 64
    %v575 = vpop.permute.xlu0 %574
    %v577 = vmul.f32 %v570, %v575
    %579 = vrot.lane.b32.xlu0 %v577, 32
    %v580 = vpop.permute.xlu0 %579
    %v582 = vadd.f32 %v572, %v580
    %v583 = vtanh.pop %v582
    %585 = vrot.lane.b32.xlu0 %v583, 64
    %v586 = vpop.permute.xlu0 %585
    %v588 = vmul.f32 %v570, %v586
    %590 = vrot.lane.b32.xlu0 %v588, 96
    %v591 = vpop.permute.xlu0 %590
    %vm593 = vcmask 785920
    %594 = vst.msk [vmem:[%s10] sm:$0xff] %vm593, %v591
    %595 = vrot.lane.b32.xlu0 %v588, 32
    %v596 = vpop.permute.xlu0 %595
    %v597 = vsel %vm51, %v596, 0
    %599 = vmatprep.subr.mxu0 0.0
    %600 = vmatpush1.msra.mxu0 0.0
    %601 = vmatprep.subr.mxu0 0.0
    %602 = vmatpush1.msra.mxu0 0.0
    %603 = vmatprep.subr.mxu0 0.0
    %604 = vmatpush1.msra.mxu0 0.0
    %605 = vmatprep.subr.mxu0 0.0
    %606 = vmatpush1.msra.mxu0 0.0
    %607 = vmatprep.subr.mxu0 0.0
    %608 = vmatpush1.msra.mxu0 0.0
    %609 = vmatprep.subr.mxu0 0.0
    %610 = vmatpush1.msra.mxu0 0.0
    %611 = vmatprep.subr.mxu0 0.0
    %612 = vmatpush1.msra.mxu0 0.0
    %613 = vmatprep.subr.mxu0 0.0
    %614 = vmatpush1.msra.mxu0 0.0
    %615 = vmatprep.subr.mxu0 0.0
    %616 = vmatpush1.msra.mxu0 0.0
    %617 = vmatprep.subr.mxu0 0.0
    %618 = vmatpush1.msra.mxu0 0.0
    %619 = vmatprep.subr.mxu0 0.0
    %620 = vmatpush1.msra.mxu0 0.0
    %621 = vmatprep.subr.mxu0 0.0
    %622 = vmatpush1.msra.mxu0 0.0
    %623 = vmatprep.subr.mxu0 0.0
    %624 = vmatpush1.msra.mxu0 %v276
    %625 = vmatprep.subr.mxu0 0.0
    %626 = vmatpush1.msra.mxu0 %v275
    %627 = vmatprep.subr.mxu0 0.0
    %628 = vmatpush1.msra.mxu0 %v274
    %629 = vmatprep.subr.mxu0 0.0
    %630 = vmatpush1.msra.mxu0 %v273
    %631 = vmatprep.subr.mxu0 0.0
    %632 = vmatpush2.msra.mxu0 0.0
    %633 = vmatprep.subr.mxu0 0.0
    %634 = vmatpush2.msra.mxu0 0.0
    %635 = vmatprep.subr.mxu0 0.0
    %636 = vmatpush2.msra.mxu0 0.0
    %637 = vmatprep.subr.mxu0 0.0
    %638 = vmatpush2.msra.mxu0 0.0
    %639 = vmatprep.subr.mxu0 0.0
    %640 = vmatpush2.msra.mxu0 0.0
    %641 = vmatprep.subr.mxu0 0.0
    %642 = vmatpush2.msra.mxu0 0.0
    %643 = vmatprep.subr.mxu0 0.0
    %644 = vmatpush2.msra.mxu0 0.0
    %645 = vmatprep.subr.mxu0 0.0
    %646 = vmatpush2.msra.mxu0 0.0
    %647 = vmatprep.subr.mxu0 0.0
    %648 = vmatpush2.msra.mxu0 0.0
    %649 = vmatprep.subr.mxu0 0.0
    %650 = vmatpush2.msra.mxu0 0.0
    %651 = vmatprep.subr.mxu0 0.0
    %652 = vmatpush2.msra.mxu0 0.0
    %653 = vmatprep.subr.mxu0 0.0
    %654 = vmatpush2.msra.mxu0 0.0
    %655 = vmatprep.subr.mxu0 0.0
    %656 = vmatpush2.msra.mxu0 0.0
    %657 = vmatprep.subr.mxu0 0.0
    %658 = vmatpush2.msra.mxu0 0.0
    %659 = vmatprep.subr.mxu0 0.0
    %660 = vmatpush2.msra.mxu0 0.0
    %661 = vmatprep.subr.mxu0 0.0
    %662 = vmatpush2.msra.mxu0 0.0
    %663 = vmatprep.mubr.f32.mxu0 0.0
    %664 = vmatmul.mubr.f32.gmra.mxu0 %v597
    %v665 = vpop.f32.mrf.mxu0
    %v666 = vadd.f32 0.0, %v665
    %v667 = vpop.f32.mrf.mxu0
    %668 = vdwg.mxu0
    %v669 = vadd.f32 %v250, %v666
    %v670 = vxor.u32 %v669, 2147483648
    %v671 = vmul.f32 %v670, 1.442695
    %v672 = vpow.pop %v671
    %v673 = vadd.f32 %v672, 1.0
    %v674 = vrcp.pop %v673
    %v675 = vmul.f32 1.0, %v674
    %v676 = vtanh.pop %v669
    %v677 = vmul.f32 %v675, %v582
    %679 = vrot.lane.b32.xlu0 %v676, 64
    %v680 = vpop.permute.xlu0 %679
    %v682 = vmul.f32 %v675, %v680
    %684 = vrot.lane.b32.xlu0 %v682, 32
    %v685 = vpop.permute.xlu0 %684
    %v687 = vadd.f32 %v677, %v685
    %v688 = vtanh.pop %v687
    %690 = vrot.lane.b32.xlu0 %v688, 64
    %v691 = vpop.permute.xlu0 %690
    %v693 = vmul.f32 %v675, %v691
    %vm694 = vcmask 1048320
    %695 = vst.msk [vmem:[%s10] sm:$0xff] %vm694, %v693
    %697 = vrot.lane.b32.xlu0 %v693, 32
    %v698 = vpop.permute.xlu0 %697
    %v699 = vsel %vm51, %v698, 0
    %701 = vmatprep.subr.mxu0 0.0
    %702 = vmatpush1.msra.mxu0 0.0
    %703 = vmatprep.subr.mxu0 0.0
    %704 = vmatpush1.msra.mxu0 0.0
    %705 = vmatprep.subr.mxu0 0.0
    %706 = vmatpush1.msra.mxu0 0.0
    %707 = vmatprep.subr.mxu0 0.0
    %708 = vmatpush1.msra.mxu0 0.0
    %709 = vmatprep.subr.mxu0 0.0
    %710 = vmatpush1.msra.mxu0 0.0
    %711 = vmatprep.subr.mxu0 0.0
    %712 = vmatpush1.msra.mxu0 0.0
    %713 = vmatprep.subr.mxu0 0.0
    %714 = vmatpush1.msra.mxu0 0.0
    %715 = vmatprep.subr.mxu0 0.0
    %716 = vmatpush1.msra.mxu0 0.0
    %717 = vmatprep.subr.mxu0 0.0
    %718 = vmatpush1.msra.mxu0 0.0
    %719 = vmatprep.subr.mxu0 0.0
    %720 = vmatpush1.msra.mxu0 0.0
    %721 = vmatprep.subr.mxu0 0.0
    %722 = vmatpush1.msra.mxu0 0.0
    %723 = vmatprep.subr.mxu0 0.0
    %724 = vmatpush1.msra.mxu0 0.0
    %725 = vmatprep.subr.mxu0 0.0
    %726 = vmatpush1.msra.mxu0 %v276
    %727 = vmatprep.subr.mxu0 0.0
    %728 = vmatpush1.msra.mxu0 %v275
    %729 = vmatprep.subr.mxu0 0.0
    %730 = vmatpush1.msra.mxu0 %v274
    %731 = vmatprep.subr.mxu0 0.0
    %732 = vmatpush1.msra.mxu0 %v273
    %733 = vmatprep.subr.mxu0 0.0
    %734 = vmatpush2.msra.mxu0 0.0
    %735 = vmatprep.subr.mxu0 0.0
    %736 = vmatpush2.msra.mxu0 0.0
    %737 = vmatprep.subr.mxu0 0.0
    %738 = vmatpush2.msra.mxu0 0.0
    %739 = vmatprep.subr.mxu0 0.0
    %740 = vmatpush2.msra.mxu0 0.0
    %741 = vmatprep.subr.mxu0 0.0
    %742 = vmatpush2.msra.mxu0 0.0
    %743 = vmatprep.subr.mxu0 0.0
    %744 = vmatpush2.msra.mxu0 0.0
    %745 = vmatprep.subr.mxu0 0.0
    %746 = vmatpush2.msra.mxu0 0.0
    %747 = vmatprep.subr.mxu0 0.0
    %748 = vmatpush2.msra.mxu0 0.0
    %749 = vmatprep.subr.mxu0 0.0
    %750 = vmatpush2.msra.mxu0 0.0
    %751 = vmatprep.subr.mxu0 0.0
    %752 = vmatpush2.msra.mxu0 0.0
    %753 = vmatprep.subr.mxu0 0.0
    %754 = vmatpush2.msra.mxu0 0.0
    %755 = vmatprep.subr.mxu0 0.0
    %756 = vmatpush2.msra.mxu0 0.0
    %757 = vmatprep.subr.mxu0 0.0
    %758 = vmatpush2.msra.mxu0 0.0
    %759 = vmatprep.subr.mxu0 0.0
    %760 = vmatpush2.msra.mxu0 0.0
    %761 = vmatprep.subr.mxu0 0.0
    %762 = vmatpush2.msra.mxu0 0.0
    %763 = vmatprep.subr.mxu0 0.0
    %764 = vmatpush2.msra.mxu0 0.0
    %765 = vmatprep.mubr.f32.mxu0 0.0
    %766 = vmatmul.mubr.f32.gmra.mxu0 %v699
    %v767 = vpop.f32.mrf.mxu0
    %v768 = vadd.f32 0.0, %v767
    %v769 = vpop.f32.mrf.mxu0
    %770 = vdwg.mxu0
    %v771 = vadd.f32 %v255, %v768
    %v772 = vxor.u32 %v771, 2147483648
    %v773 = vmul.f32 %v772, 1.442695
    %v774 = vpow.pop %v773
    %v775 = vadd.f32 %v774, 1.0
    %v776 = vrcp.pop %v775
    %v777 = vmul.f32 1.0, %v776
    %v778 = vtanh.pop %v771
    %v779 = vmul.f32 %v777, %v687
    %781 = vrot.lane.b32.xlu0 %v778, 64
    %v782 = vpop.permute.xlu0 %781
    %v784 = vmul.f32 %v777, %v782
    %786 = vrot.lane.b32.xlu0 %v784, 32
    %v787 = vpop.permute.xlu0 %786
    %v789 = vadd.f32 %v779, %v787
    %v790 = vtanh.pop %v789
    %792 = vrot.lane.b32.xlu0 %v790, 64
    %v793 = vpop.permute.xlu0 %792
    %v795 = vmul.f32 %v777, %v793
    %797 = vrot.lane.b32.xlu0 %v795, 32
    %v798 = vpop.permute.xlu0 %797
    %800 = vst.msk [vmem:[%s10 + $0x8] sm:$0xff] %vm51, %v798
    %v801 = vsel %vm51, %v798, 0
    %803 = vmatprep.subr.mxu0 0.0
    %804 = vmatpush1.msra.mxu0 0.0
    %805 = vmatprep.subr.mxu0 0.0
    %806 = vmatpush1.msra.mxu0 0.0
    %807 = vmatprep.subr.mxu0 0.0
    %808 = vmatpush1.msra.mxu0 0.0
    %809 = vmatprep.subr.mxu0 0.0
    %810 = vmatpush1.msra.mxu0 0.0
    %811 = vmatprep.subr.mxu0 0.0
    %812 = vmatpush1.msra.mxu0 0.0
    %813 = vmatprep.subr.mxu0 0.0
    %814 = vmatpush1.msra.mxu0 0.0
    %815 = vmatprep.subr.mxu0 0.0
    %816 = vmatpush1.msra.mxu0 0.0
    %817 = vmatprep.subr.mxu0 0.0
    %818 = vmatpush1.msra.mxu0 0.0
    %819 = vmatprep.subr.mxu0 0.0
    %820 = vmatpush1.msra.mxu0 0.0
    %821 = vmatprep.subr.mxu0 0.0
    %822 = vmatpush1.msra.mxu0 0.0
    %823 = vmatprep.subr.mxu0 0.0
    %824 = vmatpush1.msra.mxu0 0.0
    %825 = vmatprep.subr.mxu0 0.0
    %826 = vmatpush1.msra.mxu0 0.0
    %827 = vmatprep.subr.mxu0 0.0
    %828 = vmatpush1.msra.mxu0 %v276
    %829 = vmatprep.subr.mxu0 0.0
    %830 = vmatpush1.msra.mxu0 %v275
    %831 = vmatprep.subr.mxu0 0.0
    %832 = vmatpush1.msra.mxu0 %v274
    %833 = vmatprep.subr.mxu0 0.0
    %834 = vmatpush1.msra.mxu0 %v273
    %835 = vmatprep.subr.mxu0 0.0
    %836 = vmatpush2.msra.mxu0 0.0
    %837 = vmatprep.subr.mxu0 0.0
    %838 = vmatpush2.msra.mxu0 0.0
    %839 = vmatprep.subr.mxu0 0.0
    %840 = vmatpush2.msra.mxu0 0.0
    %841 = vmatprep.subr.mxu0 0.0
    %842 = vmatpush2.msra.mxu0 0.0
    %843 = vmatprep.subr.mxu0 0.0
    %844 = vmatpush2.msra.mxu0 0.0
    %845 = vmatprep.subr.mxu0 0.0
    %846 = vmatpush2.msra.mxu0 0.0
    %847 = vmatprep.subr.mxu0 0.0
    %848 = vmatpush2.msra.mxu0 0.0
    %849 = vmatprep.subr.mxu0 0.0
    %850 = vmatpush2.msra.mxu0 0.0
    %851 = vmatprep.subr.mxu0 0.0
    %852 = vmatpush2.msra.mxu0 0.0
    %853 = vmatprep.subr.mxu0 0.0
    %854 = vmatpush2.msra.mxu0 0.0
    %855 = vmatprep.subr.mxu0 0.0
    %856 = vmatpush2.msra.mxu0 0.0
    %857 = vmatprep.subr.mxu0 0.0
    %858 = vmatpush2.msra.mxu0 0.0
    %859 = vmatprep.subr.mxu0 0.0
    %860 = vmatpush2.msra.mxu0 0.0
    %861 = vmatprep.subr.mxu0 0.0
    %862 = vmatpush2.msra.mxu0 0.0
    %863 = vmatprep.subr.mxu0 0.0
    %864 = vmatpush2.msra.mxu0 0.0
    %865 = vmatprep.subr.mxu0 0.0
    %866 = vmatpush2.msra.mxu0 0.0
    %867 = vmatprep.mubr.f32.mxu0 0.0
    %868 = vmatmul.mubr.f32.gmra.mxu0 %v801
    %v869 = vpop.f32.mrf.mxu0
    %v870 = vadd.f32 0.0, %v869
    %v871 = vpop.f32.mrf.mxu0
    %872 = vdwg.mxu0
    %v873 = vadd.f32 %v260, %v870
    %v874 = vxor.u32 %v873, 2147483648
    %v875 = vmul.f32 %v874, 1.442695
    %v876 = vpow.pop %v875
    %v877 = vadd.f32 %v876, 1.0
    %v878 = vrcp.pop %v877
    %v879 = vmul.f32 1.0, %v878
    %v880 = vtanh.pop %v873
    %v881 = vmul.f32 %v879, %v789
    %883 = vrot.lane.b32.xlu0 %v880, 64
    %v884 = vpop.permute.xlu0 %883
    %v886 = vmul.f32 %v879, %v884
    %888 = vrot.lane.b32.xlu0 %v886, 32
    %v889 = vpop.permute.xlu0 %888
    %v891 = vadd.f32 %v881, %v889
    %v892 = vtanh.pop %v891
    %894 = vrot.lane.b32.xlu0 %v892, 64
    %v895 = vpop.permute.xlu0 %894
    %v897 = vmul.f32 %v879, %v895
    %899 = vrot.lane.b32.xlu0 %v897, 64
    %v900 = vpop.permute.xlu0 %899
    %902 = vst.msk [vmem:[%s10 + $0x8] sm:$0xff] %vm488, %v900
    %903 = vrot.lane.b32.xlu0 %v897, 32
    %v904 = vpop.permute.xlu0 %903
    %v905 = vsel %vm51, %v904, 0
    %907 = vmatprep.subr.mxu0 0.0
    %908 = vmatpush1.msra.mxu0 0.0
    %909 = vmatprep.subr.mxu0 0.0
    %910 = vmatpush1.msra.mxu0 0.0
    %911 = vmatprep.subr.mxu0 0.0
    %912 = vmatpush1.msra.mxu0 0.0
    %913 = vmatprep.subr.mxu0 0.0
    %914 = vmatpush1.msra.mxu0 0.0
    %915 = vmatprep.subr.mxu0 0.0
    %916 = vmatpush1.msra.mxu0 0.0
    %917 = vmatprep.subr.mxu0 0.0
    %918 = vmatpush1.msra.mxu0 0.0
    %919 = vmatprep.subr.mxu0 0.0
    %920 = vmatpush1.msra.mxu0 0.0
    %921 = vmatprep.subr.mxu0 0.0
    %922 = vmatpush1.msra.mxu0 0.0
    %923 = vmatprep.subr.mxu0 0.0
    %924 = vmatpush1.msra.mxu0 0.0
    %925 = vmatprep.subr.mxu0 0.0
    %926 = vmatpush1.msra.mxu0 0.0
    %927 = vmatprep.subr.mxu0 0.0
    %928 = vmatpush1.msra.mxu0 0.0
    %929 = vmatprep.subr.mxu0 0.0
    %930 = vmatpush1.msra.mxu0 0.0
    %931 = vmatprep.subr.mxu0 0.0
    %932 = vmatpush1.msra.mxu0 %v276
    %933 = vmatprep.subr.mxu0 0.0
    %934 = vmatpush1.msra.mxu0 %v275
    %935 = vmatprep.subr.mxu0 0.0
    %936 = vmatpush1.msra.mxu0 %v274
    %937 = vmatprep.subr.mxu0 0.0
    %938 = vmatpush1.msra.mxu0 %v273
    %939 = vmatprep.subr.mxu0 0.0
    %940 = vmatpush2.msra.mxu0 0.0
    %941 = vmatprep.subr.mxu0 0.0
    %942 = vmatpush2.msra.mxu0 0.0
    %943 = vmatprep.subr.mxu0 0.0
    %944 = vmatpush2.msra.mxu0 0.0
    %945 = vmatprep.subr.mxu0 0.0
    %946 = vmatpush2.msra.mxu0 0.0
    %947 = vmatprep.subr.mxu0 0.0
    %948 = vmatpush2.msra.mxu0 0.0
    %949 = vmatprep.subr.mxu0 0.0
    %950 = vmatpush2.msra.mxu0 0.0
    %951 = vmatprep.subr.mxu0 0.0
    %952 = vmatpush2.msra.mxu0 0.0
    %953 = vmatprep.subr.mxu0 0.0
    %954 = vmatpush2.msra.mxu0 0.0
    %955 = vmatprep.subr.mxu0 0.0
    %956 = vmatpush2.msra.mxu0 0.0
    %957 = vmatprep.subr.mxu0 0.0
    %958 = vmatpush2.msra.mxu0 0.0
    %959 = vmatprep.subr.mxu0 0.0
    %960 = vmatpush2.msra.mxu0 0.0
    %961 = vmatprep.subr.mxu0 0.0
    %962 = vmatpush2.msra.mxu0 0.0
    %963 = vmatprep.subr.mxu0 0.0
    %964 = vmatpush2.msra.mxu0 0.0
    %965 = vmatprep.subr.mxu0 0.0
    %966 = vmatpush2.msra.mxu0 0.0
    %967 = vmatprep.subr.mxu0 0.0
    %968 = vmatpush2.msra.mxu0 0.0
    %969 = vmatprep.subr.mxu0 0.0
    %970 = vmatpush2.msra.mxu0 0.0
    %971 = vmatprep.mubr.f32.mxu0 0.0
    %972 = vmatmul.mubr.f32.gmra.mxu0 %v905
    %v973 = vpop.f32.mrf.mxu0
    %v974 = vadd.f32 0.0, %v973
    %v975 = vpop.f32.mrf.mxu0
    %976 = vdwg.mxu0
    %v977 = vadd.f32 %v265, %v974
    %v978 = vxor.u32 %v977, 2147483648
    %v979 = vmul.f32 %v978, 1.442695
    %v980 = vpow.pop %v979
    %v981 = vadd.f32 %v980, 1.0
    %v982 = vrcp.pop %v981
    %v983 = vmul.f32 1.0, %v982
    %v984 = vtanh.pop %v977
    %v985 = vmul.f32 %v983, %v891
    %987 = vrot.lane.b32.xlu0 %v984, 64
    %v988 = vpop.permute.xlu0 %987
    %v990 = vmul.f32 %v983, %v988
    %992 = vrot.lane.b32.xlu0 %v990, 32
    %v993 = vpop.permute.xlu0 %992
    %v995 = vadd.f32 %v985, %v993
    %v996 = vtanh.pop %v995
    %998 = vrot.lane.b32.xlu0 %v996, 64
    %v999 = vpop.permute.xlu0 %998
    %v1001 = vmul.f32 %v983, %v999
    %1003 = vrot.lane.b32.xlu0 %v1001, 96
    %v1004 = vpop.permute.xlu0 %1003
    %1006 = vst.msk [vmem:[%s10 + $0x8] sm:$0xff] %vm593, %v1004
    %1007 = vrot.lane.b32.xlu0 %v1001, 32
    %v1008 = vpop.permute.xlu0 %1007
    %v1009 = vsel %vm51, %v1008, 0
    %1011 = vmatprep.subr.mxu0 0.0
    %1012 = vmatpush1.msra.mxu0 0.0
    %1013 = vmatprep.subr.mxu0 0.0
    %1014 = vmatpush1.msra.mxu0 0.0
    %1015 = vmatprep.subr.mxu0 0.0
    %1016 = vmatpush1.msra.mxu0 0.0
    %1017 = vmatprep.subr.mxu0 0.0
    %1018 = vmatpush1.msra.mxu0 0.0
    %1019 = vmatprep.subr.mxu0 0.0
    %1020 = vmatpush1.msra.mxu0 0.0
    %1021 = vmatprep.subr.mxu0 0.0
    %1022 = vmatpush1.msra.mxu0 0.0
    %1023 = vmatprep.subr.mxu0 0.0
    %1024 = vmatpush1.msra.mxu0 0.0
    %1025 = vmatprep.subr.mxu0 0.0
    %1026 = vmatpush1.msra.mxu0 0.0
    %1027 = vmatprep.subr.mxu0 0.0
    %1028 = vmatpush1.msra.mxu0 0.0
    %1029 = vmatprep.subr.mxu0 0.0
    %1030 = vmatpush1.msra.mxu0 0.0
    %1031 = vmatprep.subr.mxu0 0.0
    %1032 = vmatpush1.msra.mxu0 0.0
    %1033 = vmatprep.subr.mxu0 0.0
    %1034 = vmatpush1.msra.mxu0 0.0
    %1035 = vmatprep.subr.mxu0 0.0
    %1036 = vmatpush1.msra.mxu0 %v276
    %1037 = vmatprep.subr.mxu0 0.0
    %1038 = vmatpush1.msra.mxu0 %v275
    %1039 = vmatprep.subr.mxu0 0.0
    %1040 = vmatpush1.msra.mxu0 %v274
    %1041 = vmatprep.subr.mxu0 0.0
    %1042 = vmatpush1.msra.mxu0 %v273
    %1043 = vmatprep.subr.mxu0 0.0
    %1044 = vmatpush2.msra.mxu0 0.0
    %1045 = vmatprep.subr.mxu0 0.0
    %1046 = vmatpush2.msra.mxu0 0.0
    %1047 = vmatprep.subr.mxu0 0.0
    %1048 = vmatpush2.msra.mxu0 0.0
    %1049 = vmatprep.subr.mxu0 0.0
    %1050 = vmatpush2.msra.mxu0 0.0
    %1051 = vmatprep.subr.mxu0 0.0
    %1052 = vmatpush2.msra.mxu0 0.0
    %1053 = vmatprep.subr.mxu0 0.0
    %1054 = vmatpush2.msra.mxu0 0.0
    %1055 = vmatprep.subr.mxu0 0.0
    %1056 = vmatpush2.msra.mxu0 0.0
    %1057 = vmatprep.subr.mxu0 0.0
    %1058 = vmatpush2.msra.mxu0 0.0
    %1059 = vmatprep.subr.mxu0 0.0
    %1060 = vmatpush2.msra.mxu0 0.0
    %1061 = vmatprep.subr.mxu0 0.0
    %1062 = vmatpush2.msra.mxu0 0.0
    %1063 = vmatprep.subr.mxu0 0.0
    %1064 = vmatpush2.msra.mxu0 0.0
    %1065 = vmatprep.subr.mxu0 0.0
    %1066 = vmatpush2.msra.mxu0 0.0
    %1067 = vmatprep.subr.mxu0 0.0
    %1068 = vmatpush2.msra.mxu0 0.0
    %1069 = vmatprep.subr.mxu0 0.0
    %1070 = vmatpush2.msra.mxu0 0.0
    %1071 = vmatprep.subr.mxu0 0.0
    %1072 = vmatpush2.msra.mxu0 0.0
    %1073 = vmatprep.subr.mxu0 0.0
    %1074 = vmatpush2.msra.mxu0 0.0
    %1075 = vmatprep.mubr.f32.mxu0 0.0
    %1076 = vmatmul.mubr.f32.gmra.mxu0 %v1009
    %v1077 = vpop.f32.mrf.mxu0
    %v1078 = vadd.f32 0.0, %v1077
    %v1079 = vpop.f32.mrf.mxu0
    %1080 = vdwg.mxu0
    %v1081 = vadd.f32 %v270, %v1078
    %v1082 = vxor.u32 %v1081, 2147483648
    %v1083 = vmul.f32 %v1082, 1.442695
    %v1084 = vpow.pop %v1083
    %v1085 = vadd.f32 %v1084, 1.0
    %v1086 = vrcp.pop %v1085
    %v1087 = vmul.f32 1.0, %v1086
    %v1088 = vtanh.pop %v1081
    %v1089 = vmul.f32 %v1087, %v995
    %1091 = vrot.lane.b32.xlu0 %v1088, 64
    %v1092 = vpop.permute.xlu0 %1091
    %v1094 = vmul.f32 %v1087, %v1092
    %1096 = vrot.lane.b32.xlu0 %v1094, 32
    %v1097 = vpop.permute.xlu0 %1096
    %v1099 = vadd.f32 %v1089, %v1097
    %v1100 = vtanh.pop %v1099
    %1102 = vrot.lane.b32.xlu0 %v1100, 64
    %v1103 = vpop.permute.xlu0 %1102
    %v1105 = vmul.f32 %v1087, %v1103
    %1106 = vst.msk [vmem:[%s10 + $0x8] sm:$0xff] %vm694, %v1105
    %1108 = vrot.lane.b32.xlu0 %v1105, 32
    %v1109 = vpop.permute.xlu0 %1108
    %1111 = vst.msk [vmem:[%s11] sm:$0xff] %vm51, %v1109
    %1113 = vrot.lane.b32.xlu0 %v1099, 96
    %v1114 = vpop.permute.xlu0 %1113
    %s1116 = scalar_lea.vmem %s11, 8
    %1117 = vst.msk [vmem:[%s1116] sm:$0xff] %vm51, %v1114
    %v1118 = vld [vmem:[%s6] sm:$0xff]
    %v1119 = vld [vmem:[%s6 + $0x8] sm:$0xf]
    %v1120 = vld [vmem:[%s6 + $0x10] sm:$0xff]
    %v1121 = vld [vmem:[%s6 + $0x18] sm:$0xf]
    %v1122 = vld [vmem:[%s6 + $0x20] sm:$0xff]
    %v1123 = vld [vmem:[%s6 + $0x28] sm:$0xf]
    %v1124 = vld [vmem:[%s6 + $0x30] sm:$0xff]
    %v1125 = vld [vmem:[%s6 + $0x38] sm:$0xf]
    %v1126 = vld [vmem:[%s6 + $0x40] sm:$0xff]
    %v1127 = vld [vmem:[%s6 + $0x48] sm:$0xf]
    %v1128 = vld [vmem:[%s6 + $0x50] sm:$0xff]
    %v1129 = vld [vmem:[%s6 + $0x58] sm:$0xf]
    %v1130 = vld [vmem:[%s6 + $0x60] sm:$0xff]
    %v1131 = vld [vmem:[%s6 + $0x68] sm:$0xf]
    %v1132 = vld [vmem:[%s6 + $0x70] sm:$0xff]
    %v1133 = vld [vmem:[%s6 + $0x78] sm:$0xf]
    %v1134 = vcombine.high %v1105, %v1105
    %v1136 = vunpack.c.l.s4 1966171168
    %v1137 = vunpack.c.0.s8 %v1136
    %v1138 = vlaneseq
    %v1139 = vshrl.u32 %v1138, 7
    %v1140 = vsub.s32 %v1137, %v1139
    %v1141 = vrot.slane %v1105, %v1140
    %v1143 = vunpack.c.l.s4 1966171168
    %v1144 = vunpack.c.0.s8 %v1143
    %v1145 = vlaneseq
    %v1146 = vshrl.u32 %v1145, 7
    %v1147 = vsub.s32 %v1144, %v1146
    %v1148 = vrot.slane %v1134, %v1147
    %v1149 = vcombine.high %v1141, %v1141
    %v1150 = vcombine.high %v1148, %v1148
    %v1152 = vunpack.c.l.s4 1966171168
    %v1153 = vunpack.c.0.s8 %v1152
    %v1154 = vlaneseq
    %v1155 = vshrl.u32 %v1154, 7
    %v1156 = vsub.s32 %v1153, %v1155
    %v1157 = vrot.slane %v1141, %v1156
    %v1159 = vunpack.c.l.s4 1966171168
    %v1160 = vunpack.c.0.s8 %v1159
    %v1161 = vlaneseq
    %v1162 = vshrl.u32 %v1161, 7
    %v1163 = vsub.s32 %v1160, %v1162
    %v1164 = vrot.slane %v1148, %v1163
    %v1166 = vunpack.c.l.s4 1966171168
    %v1167 = vunpack.c.0.s8 %v1166
    %v1168 = vlaneseq
    %v1169 = vshrl.u32 %v1168, 7
    %v1170 = vsub.s32 %v1167, %v1169
    %v1171 = vrot.slane %v1149, %v1170
    %v1173 = vunpack.c.l.s4 1966171168
    %v1174 = vunpack.c.0.s8 %v1173
    %v1175 = vlaneseq
    %v1176 = vshrl.u32 %v1175, 7
    %v1177 = vsub.s32 %v1174, %v1176
    %v1178 = vrot.slane %v1150, %v1177
    %v1179 = vcombine.high %v1157, %v1157
    %v1180 = vcombine.high %v1164, %v1164
    %v1181 = vcombine.high %v1171, %v1171
    %v1182 = vcombine.high %v1178, %v1178
    %v1183 = vlaneseq
    %v1184 = vshrl.u32 %v1183, 7
    %v1185 = vsub.s32 0, %v1184
    %v1186 = vrot.slane %v1157, %v1185
    %v1187 = vlaneseq
    %v1188 = vshrl.u32 %v1187, 7
    %v1189 = vsub.s32 0, %v1188
    %v1190 = vrot.slane %v1171, %v1189
    %v1191 = vlaneseq
    %v1192 = vshrl.u32 %v1191, 7
    %v1193 = vsub.s32 0, %v1192
    %v1194 = vrot.slane %v1179, %v1193
    %v1195 = vlaneseq
    %v1196 = vshrl.u32 %v1195, 7
    %v1197 = vsub.s32 0, %v1196
    %v1198 = vrot.slane %v1181, %v1197
    %v1199 = vlaneseq
    %v1200 = vshrl.u32 %v1199, 7
    %v1201 = vsub.s32 0, %v1200
    %v1202 = vrot.slane %v1164, %v1201
    %v1203 = vlaneseq
    %v1204 = vshrl.u32 %v1203, 7
    %v1205 = vsub.s32 0, %v1204
    %v1206 = vrot.slane %v1178, %v1205
    %v1207 = vlaneseq
    %v1208 = vshrl.u32 %v1207, 7
    %v1209 = vsub.s32 0, %v1208
    %v1210 = vrot.slane %v1180, %v1209
    %v1211 = vlaneseq
    %v1212 = vshrl.u32 %v1211, 7
    %v1213 = vsub.s32 0, %v1212
    %v1214 = vrot.slane %v1182, %v1213
    %1215 = vrot.lane.b32.xlu0 %v1186, 32
    %v1216 = vpop.permute.xlu0 %1215
    %1217 = vrot.lane.b32.xlu0 %v1190, 32
    %v1218 = vpop.permute.xlu0 %1217
    %1219 = vrot.lane.b32.xlu0 %v1194, 32
    %v1220 = vpop.permute.xlu0 %1219
    %1221 = vrot.lane.b32.xlu0 %v1198, 32
    %v1222 = vpop.permute.xlu0 %1221
    %1223 = vrot.lane.b32.xlu0 %v1202, 32
    %v1224 = vpop.permute.xlu0 %1223
    %1225 = vrot.lane.b32.xlu0 %v1206, 32
    %v1226 = vpop.permute.xlu0 %1225
    %1227 = vrot.lane.b32.xlu0 %v1210, 32
    %v1228 = vpop.permute.xlu0 %1227
    %1229 = vrot.lane.b32.xlu0 %v1214, 32
    %v1230 = vpop.permute.xlu0 %1229
    %v1239 = vmul.f32 %v1118, %v1216
    %v1240 = vmul.f32 %v1119, %v1216
    %v1241 = vmul.f32 %v1120, %v1218
    %v1242 = vmul.f32 %v1121, %v1218
    %v1243 = vmul.f32 %v1122, %v1220
    %v1244 = vmul.f32 %v1123, %v1220
    %v1245 = vmul.f32 %v1124, %v1222
    %v1246 = vmul.f32 %v1125, %v1222
    %v1247 = vmul.f32 %v1126, %v1224
    %v1248 = vmul.f32 %v1127, %v1224
    %v1249 = vmul.f32 %v1128, %v1226
    %v1250 = vmul.f32 %v1129, %v1226
    %v1251 = vmul.f32 %v1130, %v1228
    %v1252 = vmul.f32 %v1131, %v1228
    %v1253 = vmul.f32 %v1132, %v1230
    %v1254 = vmul.f32 %v1133, %v1230
    %v1255 = vsel %vm51, %v1239, 0.0
    %1256 = vadd.xlane.f32.xlu0 %v1255
    %v1257 = vpop.xlane.xlu0 %1256
    %vm1258 = vcmask 257024
    %v1259 = vsel %vm1258, %v1240, 0.0
    %1260 = vadd.xlane.f32.xlu0 %v1259
    %v1261 = vpop.xlane.xlu0 %1260
    %v1262 = vsel %vm51, %v1241, 0.0
    %1263 = vadd.xlane.f32.xlu0 %v1262
    %v1264 = vpop.xlane.xlu0 %1263
    %v1265 = vsel %vm1258, %v1242, 0.0
    %1266 = vadd.xlane.f32.xlu0 %v1265
    %v1267 = vpop.xlane.xlu0 %1266
    %v1268 = vsel %vm51, %v1243, 0.0
    %1269 = vadd.xlane.f32.xlu0 %v1268
    %v1270 = vpop.xlane.xlu0 %1269
    %v1271 = vsel %vm1258, %v1244, 0.0
    %1272 = vadd.xlane.f32.xlu0 %v1271
    %v1273 = vpop.xlane.xlu0 %1272
    %v1274 = vsel %vm51, %v1245, 0.0
    %1275 = vadd.xlane.f32.xlu0 %v1274
    %v1276 = vpop.xlane.xlu0 %1275
    %v1277 = vsel %vm1258, %v1246, 0.0
    %1278 = vadd.xlane.f32.xlu0 %v1277
    %v1279 = vpop.xlane.xlu0 %1278
    %v1280 = vsel %vm51, %v1247, 0.0
    %1281 = vadd.xlane.f32.xlu0 %v1280
    %v1282 = vpop.xlane.xlu0 %1281
    %v1283 = vsel %vm1258, %v1248, 0.0
    %1284 = vadd.xlane.f32.xlu0 %v1283
    %v1285 = vpop.xlane.xlu0 %1284
    %v1286 = vsel %vm51, %v1249, 0.0
    %1287 = vadd.xlane.f32.xlu0 %v1286
    %v1288 = vpop.xlane.xlu0 %1287
    %v1289 = vsel %vm1258, %v1250, 0.0
    %1290 = vadd.xlane.f32.xlu0 %v1289
    %v1291 = vpop.xlane.xlu0 %1290
    %v1292 = vsel %vm51, %v1251, 0.0
    %1293 = vadd.xlane.f32.xlu0 %v1292
    %v1294 = vpop.xlane.xlu0 %1293
    %v1295 = vsel %vm1258, %v1252, 0.0
    %1296 = vadd.xlane.f32.xlu0 %v1295
    %v1297 = vpop.xlane.xlu0 %1296
    %v1298 = vsel %vm51, %v1253, 0.0
    %1299 = vadd.xlane.f32.xlu0 %v1298
    %v1300 = vpop.xlane.xlu0 %1299
    %v1301 = vsel %vm1258, %v1254, 0.0
    %1302 = vadd.xlane.f32.xlu0 %v1301
    %v1303 = vpop.xlane.xlu0 %1302
    %v1320 = vlaneseq
    %v1321 = vand.u32 %v1320, 127
    %v1322 = vlaneseq
    %v1323 = vshrl.u32 %v1322, 7
    %v1324 = vsub.s32 %v1321, %v1323
    %v1325 = vrot.slane %v1257, %v1324
    %v1326 = vadd.s32 %v1321, 4294967288
    %v1327 = vlaneseq
    %v1328 = vshrl.u32 %v1327, 7
    %v1329 = vsub.s32 %v1326, %v1328
    %v1330 = vrot.slane %v1261, %v1329
    %vm1331 = vcmask 130112
    %v1332 = vsel %vm1331, %v1330, %v1325
    %v1333 = vlaneseq
    %v1334 = vshrl.u32 %v1333, 7
    %v1335 = vsub.s32 %v1321, %v1334
    %v1336 = vrot.slane %v1264, %v1335
    %v1337 = vlaneseq
    %v1338 = vshrl.u32 %v1337, 7
    %v1339 = vsub.s32 %v1326, %v1338
    %v1340 = vrot.slane %v1267, %v1339
    %v1341 = vsel %vm1331, %v1340, %v1336
    %v1342 = vlaneseq
    %v1343 = vshrl.u32 %v1342, 7
    %v1344 = vsub.s32 %v1321, %v1343
    %v1345 = vrot.slane %v1270, %v1344
    %v1346 = vlaneseq
    %v1347 = vshrl.u32 %v1346, 7
    %v1348 = vsub.s32 %v1326, %v1347
    %v1349 = vrot.slane %v1273, %v1348
    %v1350 = vsel %vm1331, %v1349, %v1345
    %v1351 = vlaneseq
    %v1352 = vshrl.u32 %v1351, 7
    %v1353 = vsub.s32 %v1321, %v1352
    %v1354 = vrot.slane %v1276, %v1353
    %v1355 = vlaneseq
    %v1356 = vshrl.u32 %v1355, 7
    %v1357 = vsub.s32 %v1326, %v1356
    %v1358 = vrot.slane %v1279, %v1357
    %v1359 = vsel %vm1331, %v1358, %v1354
    %v1360 = vlaneseq
    %v1361 = vshrl.u32 %v1360, 7
    %v1362 = vsub.s32 %v1321, %v1361
    %v1363 = vrot.slane %v1282, %v1362
    %v1364 = vlaneseq
    %v1365 = vshrl.u32 %v1364, 7
    %v1366 = vsub.s32 %v1326, %v1365
    %v1367 = vrot.slane %v1285, %v1366
    %v1368 = vsel %vm1331, %v1367, %v1363
    %v1369 = vlaneseq
    %v1370 = vshrl.u32 %v1369, 7
    %v1371 = vsub.s32 %v1321, %v1370
    %v1372 = vrot.slane %v1288, %v1371
    %v1373 = vlaneseq
    %v1374 = vshrl.u32 %v1373, 7
    %v1375 = vsub.s32 %v1326, %v1374
    %v1376 = vrot.slane %v1291, %v1375
    %v1377 = vsel %vm1331, %v1376, %v1372
    %v1378 = vlaneseq
    %v1379 = vshrl.u32 %v1378, 7
    %v1380 = vsub.s32 %v1321, %v1379
    %v1381 = vrot.slane %v1294, %v1380
    %v1382 = vlaneseq
    %v1383 = vshrl.u32 %v1382, 7
    %v1384 = vsub.s32 %v1326, %v1383
    %v1385 = vrot.slane %v1297, %v1384
    %v1386 = vsel %vm1331, %v1385, %v1381
    %v1387 = vlaneseq
    %v1388 = vshrl.u32 %v1387, 7
    %v1389 = vsub.s32 %v1321, %v1388
    %v1390 = vrot.slane %v1300, %v1389
    %v1391 = vlaneseq
    %v1392 = vshrl.u32 %v1391, 7
    %v1393 = vsub.s32 %v1326, %v1392
    %v1394 = vrot.slane %v1303, %v1393
    %v1395 = vsel %vm1331, %v1394, %v1390
    %vm1396 = vcmask 1041409
    %v1397 = vsel %vm1396, %v1341, %v1332
    %vm1398 = vcmask 1042434
    %v1399 = vsel %vm1398, %v1350, %v1397
    %vm1400 = vcmask 1043459
    %v1401 = vsel %vm1400, %v1359, %v1399
    %vm1402 = vcmask 1044484
    %v1403 = vsel %vm1402, %v1368, %v1401
    %vm1404 = vcmask 1045509
    %v1405 = vsel %vm1404, %v1377, %v1403
    %vm1406 = vcmask 1046534
    %v1407 = vsel %vm1406, %v1386, %v1405
    %vm1408 = vcmask 1047559
    %v1409 = vsel %vm1408, %v1395, %v1407
    %vm1411 = vcmask 97280
    %v1412 = vsel %vm1411, %v1409, -inf
    %1413 = vmax.xlane.f32.xlu0 %v1412
    %v1414 = vpop.xlane.xlu0 %1413
    %v1416 = vlaneseq
    %v1417 = vshrl.u32 %v1416, 7
    %v1418 = vsub.s32 0, %v1417
    %v1419 = vrot.slane %v1414, %v1418
    %v1420 = vlaneseq
    %v1421 = vshrl.u32 %v1420, 7
    %v1422 = vsub.s32 1, %v1421
    %v1423 = vrot.slane %v1414, %v1422
    %v1424 = vlaneseq
    %v1425 = vshrl.u32 %v1424, 7
    %v1426 = vsub.s32 2, %v1425
    %v1427 = vrot.slane %v1414, %v1426
    %v1428 = vlaneseq
    %v1429 = vshrl.u32 %v1428, 7
    %v1430 = vsub.s32 3, %v1429
    %v1431 = vrot.slane %v1414, %v1430
    %v1432 = vlaneseq
    %v1433 = vshrl.u32 %v1432, 7
    %v1434 = vsub.s32 4, %v1433
    %v1435 = vrot.slane %v1414, %v1434
    %v1436 = vlaneseq
    %v1437 = vshrl.u32 %v1436, 7
    %v1438 = vsub.s32 5, %v1437
    %v1439 = vrot.slane %v1414, %v1438
    %v1440 = vlaneseq
    %v1441 = vshrl.u32 %v1440, 7
    %v1442 = vsub.s32 6, %v1441
    %v1443 = vrot.slane %v1414, %v1442
    %v1444 = vlaneseq
    %v1445 = vshrl.u32 %v1444, 7
    %v1446 = vsub.s32 7, %v1445
    %v1447 = vrot.slane %v1414, %v1446
    %v1456 = vsub.f32 %v1257, %v1419
    %v1457 = vsub.f32 %v1261, %v1419
    %v1458 = vsub.f32 %v1264, %v1423
    %v1459 = vsub.f32 %v1267, %v1423
    %v1460 = vsub.f32 %v1270, %v1427
    %v1461 = vsub.f32 %v1273, %v1427
    %v1462 = vsub.f32 %v1276, %v1431
    %v1463 = vsub.f32 %v1279, %v1431
    %v1464 = vsub.f32 %v1282, %v1435
    %v1465 = vsub.f32 %v1285, %v1435
    %v1466 = vsub.f32 %v1288, %v1439
    %v1467 = vsub.f32 %v1291, %v1439
    %v1468 = vsub.f32 %v1294, %v1443
    %v1469 = vsub.f32 %v1297, %v1443
    %v1470 = vsub.f32 %v1300, %v1447
    %v1471 = vsub.f32 %v1303, %v1447
    %v1472 = vmul.f32 %v1456, 1.442695
    %v1473 = vpow.pop %v1472
    %v1474 = vmul.f32 %v1457, 1.442695
    %v1475 = vpow.pop %v1474
    %v1476 = vmul.f32 %v1458, 1.442695
    %v1477 = vpow.pop %v1476
    %v1478 = vmul.f32 %v1459, 1.442695
    %v1479 = vpow.pop %v1478
    %v1480 = vmul.f32 %v1460, 1.442695
    %v1481 = vpow.pop %v1480
    %v1482 = vmul.f32 %v1461, 1.442695
    %v1483 = vpow.pop %v1482
    %v1484 = vmul.f32 %v1462, 1.442695
    %v1485 = vpow.pop %v1484
    %v1486 = vmul.f32 %v1463, 1.442695
    %v1487 = vpow.pop %v1486
    %v1488 = vmul.f32 %v1464, 1.442695
    %v1489 = vpow.pop %v1488
    %v1490 = vmul.f32 %v1465, 1.442695
    %v1491 = vpow.pop %v1490
    %v1492 = vmul.f32 %v1466, 1.442695
    %v1493 = vpow.pop %v1492
    %v1494 = vmul.f32 %v1467, 1.442695
    %v1495 = vpow.pop %v1494
    %v1496 = vmul.f32 %v1468, 1.442695
    %v1497 = vpow.pop %v1496
    %v1498 = vmul.f32 %v1469, 1.442695
    %v1499 = vpow.pop %v1498
    %v1500 = vmul.f32 %v1470, 1.442695
    %v1501 = vpow.pop %v1500
    %v1502 = vmul.f32 %v1471, 1.442695
    %v1503 = vpow.pop %v1502
    %1520 = vset.pattern.permute.xlu0 0
    %1521 = vperm.xlu0 %1520, %v1473
    %v1522 = vpop.permute.xlu0 %1521
    %1523 = vset.pattern.permute.xlu0 0
    %1524 = vperm.xlu0 %1523, %v1475
    %v1525 = vpop.permute.xlu0 %1524
    %1526 = vset.pattern.permute.xlu0 0
    %1527 = vperm.xlu0 %1526, %v1477
    %v1528 = vpop.permute.xlu0 %1527
    %1529 = vset.pattern.permute.xlu0 0
    %1530 = vperm.xlu0 %1529, %v1479
    %v1531 = vpop.permute.xlu0 %1530
    %1532 = vset.pattern.permute.xlu0 0
    %1533 = vperm.xlu0 %1532, %v1481
    %v1534 = vpop.permute.xlu0 %1533
    %1535 = vset.pattern.permute.xlu0 0
    %1536 = vperm.xlu0 %1535, %v1483
    %v1537 = vpop.permute.xlu0 %1536
    %1538 = vset.pattern.permute.xlu0 0
    %1539 = vperm.xlu0 %1538, %v1485
    %v1540 = vpop.permute.xlu0 %1539
    %1541 = vset.pattern.permute.xlu0 0
    %1542 = vperm.xlu0 %1541, %v1487
    %v1543 = vpop.permute.xlu0 %1542
    %1544 = vset.pattern.permute.xlu0 0
    %1545 = vperm.xlu0 %1544, %v1489
    %v1546 = vpop.permute.xlu0 %1545
    %1547 = vset.pattern.permute.xlu0 0
    %1548 = vperm.xlu0 %1547, %v1491
    %v1549 = vpop.permute.xlu0 %1548
    %1550 = vset.pattern.permute.xlu0 0
    %1551 = vperm.xlu0 %1550, %v1493
    %v1552 = vpop.permute.xlu0 %1551
    %1553 = vset.pattern.permute.xlu0 0
    %1554 = vperm.xlu0 %1553, %v1495
    %v1555 = vpop.permute.xlu0 %1554
    %1556 = vset.pattern.permute.xlu0 0
    %1557 = vperm.xlu0 %1556, %v1497
    %v1558 = vpop.permute.xlu0 %1557
    %1559 = vset.pattern.permute.xlu0 0
    %1560 = vperm.xlu0 %1559, %v1499
    %v1561 = vpop.permute.xlu0 %1560
    %1562 = vset.pattern.permute.xlu0 0
    %1563 = vperm.xlu0 %1562, %v1501
    %v1564 = vpop.permute.xlu0 %1563
    %1565 = vset.pattern.permute.xlu0 0
    %1566 = vperm.xlu0 %1565, %v1503
    %v1567 = vpop.permute.xlu0 %1566
    %v1568 = vlaneseq
    %v1569 = vshrl.u32 %v1568, 7
    %v1570 = vsub.s32 %v1321, %v1569
    %v1571 = vrot.slane %v1522, %v1570
    %v1572 = vlaneseq
    %v1573 = vshrl.u32 %v1572, 7
    %v1574 = vsub.s32 %v1326, %v1573
    %v1575 = vrot.slane %v1525, %v1574
    %v1576 = vsel %vm1331, %v1575, %v1571
    %v1577 = vlaneseq
    %v1578 = vshrl.u32 %v1577, 7
    %v1579 = vsub.s32 %v1321, %v1578
    %v1580 = vrot.slane %v1528, %v1579
    %v1581 = vlaneseq
    %v1582 = vshrl.u32 %v1581, 7
    %v1583 = vsub.s32 %v1326, %v1582
    %v1584 = vrot.slane %v1531, %v1583
    %v1585 = vsel %vm1331, %v1584, %v1580
    %v1586 = vlaneseq
    %v1587 = vshrl.u32 %v1586, 7
    %v1588 = vsub.s32 %v1321, %v1587
    %v1589 = vrot.slane %v1534, %v1588
    %v1590 = vlaneseq
    %v1591 = vshrl.u32 %v1590, 7
    %v1592 = vsub.s32 %v1326, %v1591
    %v1593 = vrot.slane %v1537, %v1592
    %v1594 = vsel %vm1331, %v1593, %v1589
    %v1595 = vlaneseq
    %v1596 = vshrl.u32 %v1595, 7
    %v1597 = vsub.s32 %v1321, %v1596
    %v1598 = vrot.slane %v1540, %v1597
    %v1599 = vlaneseq
    %v1600 = vshrl.u32 %v1599, 7
    %v1601 = vsub.s32 %v1326, %v1600
    %v1602 = vrot.slane %v1543, %v1601
    %v1603 = vsel %vm1331, %v1602, %v1598
    %v1604 = vlaneseq
    %v1605 = vshrl.u32 %v1604, 7
    %v1606 = vsub.s32 %v1321, %v1605
    %v1607 = vrot.slane %v1546, %v1606
    %v1608 = vlaneseq
    %v1609 = vshrl.u32 %v1608, 7
    %v1610 = vsub.s32 %v1326, %v1609
    %v1611 = vrot.slane %v1549, %v1610
    %v1612 = vsel %vm1331, %v1611, %v1607
    %v1613 = vlaneseq
    %v1614 = vshrl.u32 %v1613, 7
    %v1615 = vsub.s32 %v1321, %v1614
    %v1616 = vrot.slane %v1552, %v1615
    %v1617 = vlaneseq
    %v1618 = vshrl.u32 %v1617, 7
    %v1619 = vsub.s32 %v1326, %v1618
    %v1620 = vrot.slane %v1555, %v1619
    %v1621 = vsel %vm1331, %v1620, %v1616
    %v1622 = vlaneseq
    %v1623 = vshrl.u32 %v1622, 7
    %v1624 = vsub.s32 %v1321, %v1623
    %v1625 = vrot.slane %v1558, %v1624
    %v1626 = vlaneseq
    %v1627 = vshrl.u32 %v1626, 7
    %v1628 = vsub.s32 %v1326, %v1627
    %v1629 = vrot.slane %v1561, %v1628
    %v1630 = vsel %vm1331, %v1629, %v1625
    %v1631 = vlaneseq
    %v1632 = vshrl.u32 %v1631, 7
    %v1633 = vsub.s32 %v1321, %v1632
    %v1634 = vrot.slane %v1564, %v1633
    %v1635 = vlaneseq
    %v1636 = vshrl.u32 %v1635, 7
    %v1637 = vsub.s32 %v1326, %v1636
    %v1638 = vrot.slane %v1567, %v1637
    %v1639 = vsel %vm1331, %v1638, %v1634
    %v1640 = vsel %vm1396, %v1585, %v1576
    %v1641 = vsel %vm1398, %v1594, %v1640
    %v1642 = vsel %vm1400, %v1603, %v1641
    %v1643 = vsel %vm1402, %v1612, %v1642
    %v1644 = vsel %vm1404, %v1621, %v1643
    %v1645 = vsel %vm1406, %v1630, %v1644
    %v1646 = vsel %vm1408, %v1639, %v1645
    %v1648 = vsel %vm1411, %v1646, 0.0
    %1649 = vadd.xlane.f32.xlu0 %v1648
    %v1650 = vpop.xlane.xlu0 %1649
    %v1651 = vlog2.pop %v1650
    %v1652 = vmul.f32 %v1651, 0.6931472
    %v1653 = vadd.f32 %v1652, %v1414
    %v1655 = vlaneseq
    %v1656 = vshrl.u32 %v1655, 7
    %v1657 = vsub.s32 0, %v1656
    %v1658 = vrot.slane %v1653, %v1657
    %v1659 = vlaneseq
    %v1660 = vshrl.u32 %v1659, 7
    %v1661 = vsub.s32 1, %v1660
    %v1662 = vrot.slane %v1653, %v1661
    %v1663 = vlaneseq
    %v1664 = vshrl.u32 %v1663, 7
    %v1665 = vsub.s32 2, %v1664
    %v1666 = vrot.slane %v1653, %v1665
    %v1667 = vlaneseq
    %v1668 = vshrl.u32 %v1667, 7
    %v1669 = vsub.s32 3, %v1668
    %v1670 = vrot.slane %v1653, %v1669
    %v1671 = vlaneseq
    %v1672 = vshrl.u32 %v1671, 7
    %v1673 = vsub.s32 4, %v1672
    %v1674 = vrot.slane %v1653, %v1673
    %v1675 = vlaneseq
    %v1676 = vshrl.u32 %v1675, 7
    %v1677 = vsub.s32 5, %v1676
    %v1678 = vrot.slane %v1653, %v1677
    %v1679 = vlaneseq
    %v1680 = vshrl.u32 %v1679, 7
    %v1681 = vsub.s32 6, %v1680
    %v1682 = vrot.slane %v1653, %v1681
    %v1683 = vlaneseq
    %v1684 = vshrl.u32 %v1683, 7
    %v1685 = vsub.s32 7, %v1684
    %v1686 = vrot.slane %v1653, %v1685
    %v1695 = vsub.f32 %v1257, %v1658
    %v1696 = vsub.f32 %v1261, %v1658
    %v1697 = vsub.f32 %v1264, %v1662
    %v1698 = vsub.f32 %v1267, %v1662
    %v1699 = vsub.f32 %v1270, %v1666
    %v1700 = vsub.f32 %v1273, %v1666
    %v1701 = vsub.f32 %v1276, %v1670
    %v1702 = vsub.f32 %v1279, %v1670
    %v1703 = vsub.f32 %v1282, %v1674
    %v1704 = vsub.f32 %v1285, %v1674
    %v1705 = vsub.f32 %v1288, %v1678
    %v1706 = vsub.f32 %v1291, %v1678
    %v1707 = vsub.f32 %v1294, %v1682
    %v1708 = vsub.f32 %v1297, %v1682
    %v1709 = vsub.f32 %v1300, %v1686
    %v1710 = vsub.f32 %v1303, %v1686
    %1712 = vset.pattern.permute.xlu0 0
    %1713 = vperm.xlu0 %1712, %v1695
    %v1714 = vpop.permute.xlu0 %1713
    %1717 = vset.pattern.permute.xlu0 0
    %1718 = vperm.xlu0 %1717, %v1696
    %v1719 = vpop.permute.xlu0 %1718
    %1722 = vset.pattern.permute.xlu0 0
    %1723 = vperm.xlu0 %1722, %v1697
    %v1724 = vpop.permute.xlu0 %1723
    %1727 = vset.pattern.permute.xlu0 0
    %1728 = vperm.xlu0 %1727, %v1698
    %v1729 = vpop.permute.xlu0 %1728
    %1732 = vset.pattern.permute.xlu0 0
    %1733 = vperm.xlu0 %1732, %v1699
    %v1734 = vpop.permute.xlu0 %1733
    %1737 = vset.pattern.permute.xlu0 0
    %1738 = vperm.xlu0 %1737, %v1700
    %v1739 = vpop.permute.xlu0 %1738
    %1742 = vset.pattern.permute.xlu0 0
    %1743 = vperm.xlu0 %1742, %v1701
    %v1744 = vpop.permute.xlu0 %1743
    %1747 = vset.pattern.permute.xlu0 0
    %1748 = vperm.xlu0 %1747, %v1702
    %v1749 = vpop.permute.xlu0 %1748
    %1752 = vset.pattern.permute.xlu0 0
    %1753 = vperm.xlu0 %1752, %v1703
    %v1754 = vpop.permute.xlu0 %1753
    %1757 = vset.pattern.permute.xlu0 0
    %1758 = vperm.xlu0 %1757, %v1704
    %v1759 = vpop.permute.xlu0 %1758
    %1762 = vset.pattern.permute.xlu0 0
    %1763 = vperm.xlu0 %1762, %v1705
    %v1764 = vpop.permute.xlu0 %1763
    %1767 = vset.pattern.permute.xlu0 0
    %1768 = vperm.xlu0 %1767, %v1706
    %v1769 = vpop.permute.xlu0 %1768
    %1772 = vset.pattern.permute.xlu0 0
    %1773 = vperm.xlu0 %1772, %v1707
    %v1774 = vpop.permute.xlu0 %1773
    %1777 = vset.pattern.permute.xlu0 0
    %1778 = vperm.xlu0 %1777, %v1708
    %v1779 = vpop.permute.xlu0 %1778
    %1782 = vset.pattern.permute.xlu0 0
    %1783 = vperm.xlu0 %1782, %v1709
    %v1784 = vpop.permute.xlu0 %1783
    %1787 = vset.pattern.permute.xlu0 0
    %1788 = vperm.xlu0 %1787, %v1710
    %v1789 = vpop.permute.xlu0 %1788
    %v1791 = vmul.f32 %v1714, %v1118
    %v1792 = vmul.f32 %v1719, %v1119
    %v1793 = vmul.f32 %v1724, %v1120
    %v1794 = vmul.f32 %v1729, %v1121
    %v1795 = vmul.f32 %v1734, %v1122
    %v1796 = vmul.f32 %v1739, %v1123
    %v1797 = vmul.f32 %v1744, %v1124
    %v1798 = vmul.f32 %v1749, %v1125
    %v1799 = vmul.f32 %v1754, %v1126
    %v1800 = vmul.f32 %v1759, %v1127
    %v1801 = vmul.f32 %v1764, %v1128
    %v1802 = vmul.f32 %v1769, %v1129
    %v1803 = vmul.f32 %v1774, %v1130
    %v1804 = vmul.f32 %v1779, %v1131
    %v1805 = vmul.f32 %v1784, %v1132
    %v1806 = vmul.f32 %v1789, %v1133
    %v1807 = vsel %vm51, %v1791, 0.0
    %v1808 = vsel %vm1258, %v1792, 0.0
    %v1809 = vadd.f32 %v1807, %v1808
    %v1810 = vrot.slane %v1809, 4
    %v1811 = vadd.f32 %v1809, %v1810
    %v1812 = vrot.slane %v1811, 2
    %v1813 = vadd.f32 %v1811, %v1812
    %v1814 = vrot.slane %v1813, 1
    %v1815 = vadd.f32 %v1813, %v1814
    %v1816 = vsel %vm51, %v1793, 0.0
    %v1817 = vsel %vm1258, %v1794, 0.0
    %v1818 = vadd.f32 %v1816, %v1817
    %v1819 = vrot.slane %v1818, 4
    %v1820 = vadd.f32 %v1818, %v1819
    %v1821 = vrot.slane %v1820, 2
    %v1822 = vadd.f32 %v1820, %v1821
    %v1823 = vrot.slane %v1822, 1
    %v1824 = vadd.f32 %v1822, %v1823
    %v1825 = vsel %vm51, %v1795, 0.0
    %v1826 = vsel %vm1258, %v1796, 0.0
    %v1827 = vadd.f32 %v1825, %v1826
    %v1828 = vrot.slane %v1827, 4
    %v1829 = vadd.f32 %v1827, %v1828
    %v1830 = vrot.slane %v1829, 2
    %v1831 = vadd.f32 %v1829, %v1830
    %v1832 = vrot.slane %v1831, 1
    %v1833 = vadd.f32 %v1831, %v1832
    %v1834 = vsel %vm51, %v1797, 0.0
    %v1835 = vsel %vm1258, %v1798, 0.0
    %v1836 = vadd.f32 %v1834, %v1835
    %v1837 = vrot.slane %v1836, 4
    %v1838 = vadd.f32 %v1836, %v1837
    %v1839 = vrot.slane %v1838, 2
    %v1840 = vadd.f32 %v1838, %v1839
    %v1841 = vrot.slane %v1840, 1
    %v1842 = vadd.f32 %v1840, %v1841
    %v1843 = vsel %vm51, %v1799, 0.0
    %v1844 = vsel %vm1258, %v1800, 0.0
    %v1845 = vadd.f32 %v1843, %v1844
    %v1846 = vrot.slane %v1845, 4
    %v1847 = vadd.f32 %v1845, %v1846
    %v1848 = vrot.slane %v1847, 2
    %v1849 = vadd.f32 %v1847, %v1848
    %v1850 = vrot.slane %v1849, 1
    %v1851 = vadd.f32 %v1849, %v1850
    %v1852 = vsel %vm51, %v1801, 0.0
    %v1853 = vsel %vm1258, %v1802, 0.0
    %v1854 = vadd.f32 %v1852, %v1853
    %v1855 = vrot.slane %v1854, 4
    %v1856 = vadd.f32 %v1854, %v1855
    %v1857 = vrot.slane %v1856, 2
    %v1858 = vadd.f32 %v1856, %v1857
    %v1859 = vrot.slane %v1858, 1
    %v1860 = vadd.f32 %v1858, %v1859
    %v1861 = vsel %vm51, %v1803, 0.0
    %v1862 = vsel %vm1258, %v1804, 0.0
    %v1863 = vadd.f32 %v1861, %v1862
    %v1864 = vrot.slane %v1863, 4
    %v1865 = vadd.f32 %v1863, %v1864
    %v1866 = vrot.slane %v1865, 2
    %v1867 = vadd.f32 %v1865, %v1866
    %v1868 = vrot.slane %v1867, 1
    %v1869 = vadd.f32 %v1867, %v1868
    %v1870 = vsel %vm51, %v1805, 0.0
    %v1871 = vsel %vm1258, %v1806, 0.0
    %v1872 = vadd.f32 %v1870, %v1871
    %v1873 = vrot.slane %v1872, 4
    %v1874 = vadd.f32 %v1872, %v1873
    %v1875 = vrot.slane %v1874, 2
    %v1876 = vadd.f32 %v1874, %v1875
    %v1877 = vrot.slane %v1876, 1
    %v1878 = vadd.f32 %v1876, %v1877
    %v1879 = vld [vmem:[%s7] sm:$0xff]
    %v1880 = vld [vmem:[%s7 + $0x8] sm:$0xff]
    %v1881 = vld [vmem:[%s7 + $0x10] sm:$0xff]
    %v1882 = vld [vmem:[%s7 + $0x18] sm:$0xff]
    %v1883 = vld [vmem:[%s8] sm:$0xff]
    %v1884 = vld [vmem:[%s8 + $0x8] sm:$0xff]
    %v1885 = vld [vmem:[%s8 + $0x10] sm:$0xff]
    %v1886 = vld [vmem:[%s8 + $0x18] sm:$0xff]
    %v1887 = vsel %vm51, %v1109, 0
    %1889 = vmatprep.subr.mxu0 0.0
    %1890 = vmatpush1.msra.mxu0 0.0
    %1891 = vmatprep.subr.mxu0 0.0
    %1892 = vmatpush1.msra.mxu0 0.0
    %1893 = vmatprep.subr.mxu0 0.0
    %1894 = vmatpush1.msra.mxu0 0.0
    %1895 = vmatprep.subr.mxu0 0.0
    %1896 = vmatpush1.msra.mxu0 0.0
    %1897 = vmatprep.subr.mxu0 0.0
    %1898 = vmatpush1.msra.mxu0 0.0
    %1899 = vmatprep.subr.mxu0 0.0
    %1900 = vmatpush1.msra.mxu0 0.0
    %1901 = vmatprep.subr.mxu0 0.0
    %1902 = vmatpush1.msra.mxu0 0.0
    %1903 = vmatprep.subr.mxu0 0.0
    %1904 = vmatpush1.msra.mxu0 0.0
    %1905 = vmatprep.subr.mxu0 0.0
    %1906 = vmatpush1.msra.mxu0 0.0
    %1907 = vmatprep.subr.mxu0 0.0
    %1908 = vmatpush1.msra.mxu0 0.0
    %1909 = vmatprep.subr.mxu0 0.0
    %1910 = vmatpush1.msra.mxu0 0.0
    %1911 = vmatprep.subr.mxu0 0.0
    %1912 = vmatpush1.msra.mxu0 0.0
    %1913 = vmatprep.subr.mxu0 0.0
    %1914 = vmatpush1.msra.mxu0 %v1886
    %1915 = vmatprep.subr.mxu0 0.0
    %1916 = vmatpush1.msra.mxu0 %v1885
    %1917 = vmatprep.subr.mxu0 0.0
    %1918 = vmatpush1.msra.mxu0 %v1884
    %1919 = vmatprep.subr.mxu0 0.0
    %1920 = vmatpush1.msra.mxu0 %v1883
    %1921 = vmatprep.subr.mxu0 0.0
    %1922 = vmatpush2.msra.mxu0 0.0
    %1923 = vmatprep.subr.mxu0 0.0
    %1924 = vmatpush2.msra.mxu0 0.0
    %1925 = vmatprep.subr.mxu0 0.0
    %1926 = vmatpush2.msra.mxu0 0.0
    %1927 = vmatprep.subr.mxu0 0.0
    %1928 = vmatpush2.msra.mxu0 0.0
    %1929 = vmatprep.subr.mxu0 0.0
    %1930 = vmatpush2.msra.mxu0 0.0
    %1931 = vmatprep.subr.mxu0 0.0
    %1932 = vmatpush2.msra.mxu0 0.0
    %1933 = vmatprep.subr.mxu0 0.0
    %1934 = vmatpush2.msra.mxu0 0.0
    %1935 = vmatprep.subr.mxu0 0.0
    %1936 = vmatpush2.msra.mxu0 0.0
    %1937 = vmatprep.subr.mxu0 0.0
    %1938 = vmatpush2.msra.mxu0 0.0
    %1939 = vmatprep.subr.mxu0 0.0
    %1940 = vmatpush2.msra.mxu0 0.0
    %1941 = vmatprep.subr.mxu0 0.0
    %1942 = vmatpush2.msra.mxu0 0.0
    %1943 = vmatprep.subr.mxu0 0.0
    %1944 = vmatpush2.msra.mxu0 0.0
    %1945 = vmatprep.subr.mxu0 0.0
    %1946 = vmatpush2.msra.mxu0 0.0
    %1947 = vmatprep.subr.mxu0 0.0
    %1948 = vmatpush2.msra.mxu0 0.0
    %1949 = vmatprep.subr.mxu0 0.0
    %1950 = vmatpush2.msra.mxu0 0.0
    %1951 = vmatprep.subr.mxu0 0.0
    %1952 = vmatpush2.msra.mxu0 0.0
    %1953 = vmatprep.mubr.f32.mxu0 0.0
    %1954 = vmatmul.mubr.f32.gmra.mxu0 %v1887
    %v1955 = vpop.f32.mrf.mxu0
    %v1956 = vadd.f32 0.0, %v1955
    %v1957 = vpop.f32.mrf.mxu0
    %1958 = vdwg.mxu0
    %v1967 = vsel %vm1396, %v1824, %v1815
    %v1968 = vsel %vm1398, %v1833, %v1967
    %v1969 = vsel %vm1400, %v1842, %v1968
    %v1970 = vsel %vm1402, %v1851, %v1969
    %v1971 = vsel %vm1404, %v1860, %v1970
    %v1972 = vsel %vm1406, %v1869, %v1971
    %v1973 = vsel %vm1408, %v1878, %v1972
    %v1974 = vsel %vm51, %v1973, 0
    %1976 = vmatprep.subr.mxu0 0.0
    %1977 = vmatpush1.msra.mxu0 0.0
    %1978 = vmatprep.subr.mxu0 0.0
    %1979 = vmatpush1.msra.mxu0 0.0
    %1980 = vmatprep.subr.mxu0 0.0
    %1981 = vmatpush1.msra.mxu0 0.0
    %1982 = vmatprep.subr.mxu0 0.0
    %1983 = vmatpush1.msra.mxu0 0.0
    %1984 = vmatprep.subr.mxu0 0.0
    %1985 = vmatpush1.msra.mxu0 0.0
    %1986 = vmatprep.subr.mxu0 0.0
    %1987 = vmatpush1.msra.mxu0 0.0
    %1988 = vmatprep.subr.mxu0 0.0
    %1989 = vmatpush1.msra.mxu0 0.0
    %1990 = vmatprep.subr.mxu0 0.0
    %1991 = vmatpush1.msra.mxu0 0.0
    %1992 = vmatprep.subr.mxu0 0.0
    %1993 = vmatpush1.msra.mxu0 0.0
    %1994 = vmatprep.subr.mxu0 0.0
    %1995 = vmatpush1.msra.mxu0 0.0
    %1996 = vmatprep.subr.mxu0 0.0
    %1997 = vmatpush1.msra.mxu0 0.0
    %1998 = vmatprep.subr.mxu0 0.0
    %1999 = vmatpush1.msra.mxu0 0.0
    %2000 = vmatprep.subr.mxu0 0.0
    %2001 = vmatpush1.msra.mxu0 %v1882
    %2002 = vmatprep.subr.mxu0 0.0
    %2003 = vmatpush1.msra.mxu0 %v1881
    %2004 = vmatprep.subr.mxu0 0.0
    %2005 = vmatpush1.msra.mxu0 %v1880
    %2006 = vmatprep.subr.mxu0 0.0
    %2007 = vmatpush1.msra.mxu0 %v1879
    %2008 = vmatprep.subr.mxu0 0.0
    %2009 = vmatpush2.msra.mxu0 0.0
    %2010 = vmatprep.subr.mxu0 0.0
    %2011 = vmatpush2.msra.mxu0 0.0
    %2012 = vmatprep.subr.mxu0 0.0
    %2013 = vmatpush2.msra.mxu0 0.0
    %2014 = vmatprep.subr.mxu0 0.0
    %2015 = vmatpush2.msra.mxu0 0.0
    %2016 = vmatprep.subr.mxu0 0.0
    %2017 = vmatpush2.msra.mxu0 0.0
    %2018 = vmatprep.subr.mxu0 0.0
    %2019 = vmatpush2.msra.mxu0 0.0
    %2020 = vmatprep.subr.mxu0 0.0
    %2021 = vmatpush2.msra.mxu0 0.0
    %2022 = vmatprep.subr.mxu0 0.0
    %2023 = vmatpush2.msra.mxu0 0.0
    %2024 = vmatprep.subr.mxu0 0.0
    %2025 = vmatpush2.msra.mxu0 0.0
    %2026 = vmatprep.subr.mxu0 0.0
    %2027 = vmatpush2.msra.mxu0 0.0
    %2028 = vmatprep.subr.mxu0 0.0
    %2029 = vmatpush2.msra.mxu0 0.0
    %2030 = vmatprep.subr.mxu0 0.0
    %2031 = vmatpush2.msra.mxu0 0.0
    %2032 = vmatprep.subr.mxu0 0.0
    %2033 = vmatpush2.msra.mxu0 0.0
    %2034 = vmatprep.subr.mxu0 0.0
    %2035 = vmatpush2.msra.mxu0 0.0
    %2036 = vmatprep.subr.mxu0 0.0
    %2037 = vmatpush2.msra.mxu0 0.0
    %2038 = vmatprep.subr.mxu0 0.0
    %2039 = vmatpush2.msra.mxu0 0.0
    %2040 = vmatprep.mubr.f32.mxu0 0.0
    %2041 = vmatmul.mubr.f32.gmra.mxu0 %v1974
    %v2042 = vpop.f32.mrf.mxu0
    %v2043 = vadd.f32 %v1956, %v2042
    %v2044 = vpop.f32.mrf.mxu0
    %2045 = vdwg.mxu0
    %v2046 = vld [vmem:[%s9] sm:$0x1]
    %v2048 = vlaneseq
    %v2049 = vshrl.u32 %v2048, 7
    %v2050 = vsub.s32 0, %v2049
    %v2051 = vrot.slane %v2046, %v2050
    %v2053 = vadd.f32 %v2043, %v2051
    %2054 = vmax.xlane.f32.xlu0 %v2053
    %v2055 = vpop.xlane.xlu0 %2054
    %v2056 = vsub.f32 %v2053, %v2055
    %v2057 = vmul.f32 %v2056, 1.442695
    %v2058 = vpow.pop %v2057
    %2059 = vadd.xlane.f32.xlu0 %v2058
    %v2060 = vpop.xlane.xlu0 %2059
    %v2061 = vlog2.pop %v2060
    %v2062 = vmul.f32 %v2061, 0.6931472
    %v2063 = vadd.f32 %v2062, %v2055
    %v2064 = vsub.f32 %v2053, %v2063
    %2065 = vst [vmem:[%s12] sm:$0xff] %v2064
    // Predicated region
    $region46: #{rnn_decoder_forward.1} parent=1 // pred_check
      _
    $region47: #{rnn_decoder_forward.1} parent=1 // pred_check_branch
      %2067 = sbr.rel (0) target = $region49
    $region48: #{rnn_decoder_forward.1} parent=1 // pred_region
      _
    $region49: #{rnn_decoder_forward.1} parent=1 // pred_fallthru
      _
    // Predicated region
    $region50: #{rnn_decoder_forward.1} parent=1 // pred_check
      _
    $region51: #{rnn_decoder_forward.1} parent=1 // pred_check_branch
      %2069 = sbr.rel (0) target = $region53
    $region52: #{rnn_decoder_forward.1} parent=1 // pred_region
      _
    $region53: #{rnn_decoder_forward.1} parent=1 // pred_fallthru
      _
    // Predicated region
    $region54: #{rnn_decoder_forward.1} parent=1 // pred_check
      _
    $region55: #{rnn_decoder_forward.1} parent=1 // pred_check_branch
      %2071 = sbr.rel (0) target = $region57
    $region56: #{rnn_decoder_forward.1} parent=1 // pred_region
      _
    $region57: #{rnn_decoder_forward.1} parent=1 // pred_fallthru
      _
    // Predicated region
    $region58: #{rnn_decoder_forward.1} parent=1 // pred_check
      _
    $region59: #{rnn_decoder_forward.1} parent=1 // pred_check_branch
      %2073 = sbr.rel (0) target = $region61
    $region60: #{rnn_decoder_forward.1} parent=1 // pred_region
      _
    $region61: #{rnn_decoder_forward.1} parent=1 // pred_fallthru
      _
    // Predicated region
    $region62: #{rnn_decoder_forward.1} parent=1 // pred_check
      _
    $region63: #{rnn_decoder_forward.1} parent=1 // pred_check_branch
      %2075 = sbr.rel (0) target = $region65
    $region64: #{rnn_decoder_forward.1} parent=1 // pred_region
      _
    $region65: #{rnn_decoder_forward.1} parent=1 // pred_fallthru
      _
    // Predicated region
    $region66: #{rnn_decoder_forward.1} parent=1 // pred_check
      _
    $region67: #{rnn_decoder_forward.1} parent=1 // pred_check_branch
      %2077 = sbr.rel (0) target = $region69
    $region68: #{rnn_decoder_forward.1} parent=1 // pred_region
      _
    $region69: #{rnn_decoder_forward.1} parent=1 // pred_fallthru
      _
    %2078 = vsyncpa [#allocation4], 1

</llo_original>
